<compile_context>
chip_gen: v6e
topology: v6e:2x2x1
jax: 0.10.0
libtpu: 0.0.40
codegen_flags: <defaults>
</compile_context>

<pallas_src>
import math
import functools

import jax
import jax.numpy as jnp
from jax import lax
from jax.experimental import pallas as pl
from jax.experimental.pallas import tpu as pltpu


NEG_INF = -1e30


def _pick_tile(n, target, align=8):
    """Largest t <= target with t | n and (t % align == 0 or t == n)."""
    for t in range(min(target, n), 0, -1):
        if n % t == 0 and (t % align == 0 or t == n):
            return t
    return n


# --------------------------------------------------------------------------
# Kernel 1: fused QKV projection + RoPE (+ q pre-scaled by 1/sqrt(head_dim))
# --------------------------------------------------------------------------


def _qkv_rope_kernel(x_ref, w_ref, cos_ref, sin_ref, q_ref, k_ref, v_ref,
                     acc_ref, *, n_heads, n_kv_heads, head_dim, q_scale):
    kk = pl.program_id(1)

    @pl.when(kk == 0)
    def _init():
        acc_ref[...] = jnp.zeros_like(acc_ref)

    # (tm, tk) @ (tk, Nq + 2*Nkv), f32 accumulation on the MXU.
    acc_ref[...] += jnp.dot(x_ref[...], w_ref[...],
                            preferred_element_type=jnp.float32)

    @pl.when(kk == pl.num_programs(1) - 1)
    def _finalize():
        nq = n_heads * head_dim
        nkv = n_kv_heads * head_dim
        half = head_dim // 2
        tm = acc_ref.shape[0]
        acc = acc_ref[...]

        cos = cos_ref[...][:, None, :]            # (tm, 1, half)
        sin = sin_ref[...][:, None, :]            # (tm, 1, half)

        def rope(t2d, nh):
            t = t2d.reshape(tm, nh, head_dim)
            t1 = t[..., :half]
            t2 = t[..., half:]
            out = jnp.concatenate([t1 * cos - t2 * sin,
                                   t1 * sin + t2 * cos], axis=-1)
            return out.reshape(tm, nh * head_dim)

        q = rope(acc[:, :nq], n_heads) * q_scale        # fold 1/sqrt(hd) here
        k = rope(acc[:, nq:nq + nkv], n_kv_heads)
        v = acc[:, nq + nkv:]

        q_ref[...] = q.astype(q_ref.dtype)
        k_ref[...] = k.astype(k_ref.dtype)
        v_ref[...] = v.astype(v_ref.dtype)


def _qkv_rope(x2d, wqkv_t, cos_full, sin_full, n_heads, n_kv_heads, head_dim,
              block_m, block_k, vmem_limit_bytes=None):
    M, H = x2d.shape
    nq = n_heads * head_dim
    nkv = n_kv_heads * head_dim
    ntot = nq + 2 * nkv
    half = head_dim // 2

    tm = _pick_tile(M, block_m, align=8)
    tk = _pick_tile(H, block_k, align=128)
    grid = (M // tm, H // tk)

    kernel = functools.partial(
        _qkv_rope_kernel, n_heads=n_heads, n_kv_heads=n_kv_heads,
        head_dim=head_dim, q_scale=1.0 / math.sqrt(head_dim))

    return pl.pallas_call(
        kernel,
        out_shape=(
            jax.ShapeDtypeStruct((M, nq), x2d.dtype),
            jax.ShapeDtypeStruct((M, nkv), x2d.dtype),
            jax.ShapeDtypeStruct((M, nkv), x2d.dtype),
        ),
        grid_spec=pltpu.PrefetchScalarGridSpec(
            num_scalar_prefetch=0,
            grid=grid,
            in_specs=[
                pl.BlockSpec((tm, tk), lambda mi, kk: (mi, kk)),
                pl.BlockSpec((tk, ntot), lambda mi, kk: (kk, 0)),
                pl.BlockSpec((tm, half), lambda mi, kk: (mi, 0)),
                pl.BlockSpec((tm, half), lambda mi, kk: (mi, 0)),
            ],
            out_specs=(
                pl.BlockSpec((tm, nq), lambda mi, kk: (mi, 0)),
                pl.BlockSpec((tm, nkv), lambda mi, kk: (mi, 0)),
                pl.BlockSpec((tm, nkv), lambda mi, kk: (mi, 0)),
            ),
            scratch_shapes=[pltpu.VMEM((tm, ntot), jnp.float32)],
        ),
        compiler_params=pltpu.CompilerParams(
            dimension_semantics=("parallel", "arbitrary"),
            vmem_limit_bytes=vmem_limit_bytes),
    )(x2d, wqkv_t, cos_full, sin_full)


# --------------------------------------------------------------------------
# Kernel 2: flash attention (online softmax) + GQA via index_map + fused o_proj
# --------------------------------------------------------------------------


def _flash_attn_kernel(qoff_ref, q_ref, k_ref, v_ref, wo_ref, out_ref,
                       m_scr, l_scr, acc_scr, o_acc, *, block_q, block_kv):
    qi = pl.program_id(1)
    h = pl.program_id(2)
    ki = pl.program_id(3)
    n_h = pl.num_programs(2)
    n_kv = pl.num_programs(3)

    @pl.when(ki == 0)
    def _init():
        m_scr[...] = jnp.full_like(m_scr, NEG_INF)
        l_scr[...] = jnp.zeros_like(l_scr)
        acc_scr[...] = jnp.zeros_like(acc_scr)

    @pl.when(jnp.logical_and(ki == 0, h == 0))
    def _init_out():
        o_acc[...] = jnp.zeros_like(o_acc)

    q_start = qoff_ref[0] + qi * block_q       # global position of first query

    # Skip kv tiles that lie entirely in the causal future of this q tile.
    @pl.when(ki * block_kv <= q_start + block_q - 1)
    def _compute():
        q = q_ref[0, 0]                                  # (tq, hd), pre-scaled
        k = k_ref[0, 0]                                  # (tkv, hd)
        s = lax.dot_general(q, k, (((1,), (1,)), ((), ())),
                            preferred_element_type=jnp.float32)  # (tq, tkv)

        # Causal mask generated in-kernel (no (S, KV) mask DMA from HBM).
        q_pos = q_start + lax.broadcasted_iota(jnp.int32, s.shape, 0)
        k_pos = ki * block_kv + lax.broadcasted_iota(jnp.int32, s.shape, 1)
        s = jnp.where(k_pos <= q_pos, s, NEG_INF)

        m_prev = m_scr[...]
        m_new = jnp.maximum(m_prev, jnp.max(s, axis=-1, keepdims=True))
        alpha = jnp.exp(m_prev - m_new)
        p = jnp.exp(s - m_new)                           # f32 softmax math
        l_scr[...] = alpha * l_scr[...] + jnp.sum(p, axis=-1, keepdims=True)
        acc_scr[...] = alpha * acc_scr[...] + jnp.dot(
            p.astype(v_ref.dtype), v_ref[0, 0],
            preferred_element_type=jnp.float32)
        m_scr[...] = m_new

    @pl.when(ki == n_kv - 1)
    def _finalize():
        # Per-head output, normalized, then accumulated straight into the
        # (tq, hidden) o_proj accumulator -- no transpose, no HBM round-trip.
        o_h = acc_scr[...] / l_scr[...]
        o_acc[...] += jnp.dot(o_h.astype(wo_ref.dtype), wo_ref[...],
                              preferred_element_type=jnp.float32)

        @pl.when(h == n_h - 1)
        def _write():
            out_ref[0] = o_acc[...].astype(out_ref.dtype)


def _flash_attention(q, k, v, wo_t, q_offset, kv_len, block_q, block_kv,
                     vmem_limit_bytes=None):
    # q: (B, nH, S, hd); k/v: (B, nKV, KV_cap, hd); wo_t: (nH*hd, hidden)
    B, n_heads, S, hd = q.shape
    n_kv_heads = k.shape[1]
    assert n_heads % n_kv_heads == 0
    g = n_heads // n_kv_heads
    kv_cap = k.shape[2]
    hidden = wo_t.shape[1]

    tq = _pick_tile(S, block_q, align=8)
    tkv = _pick_tile(kv_cap, block_kv, align=8)
    n_kv_tiles = (kv_len + tkv - 1) // tkv     # only visit tiles w/ valid keys
    grid = (B, S // tq, n_heads, n_kv_tiles)

    kernel = functools.partial(_flash_attn_kernel, block_q=tq, block_kv=tkv)
    qoff = jnp.full((1,), q_offset, jnp.int32)

    return pl.pallas_call(
        kernel,
        out_shape=jax.ShapeDtypeStruct((B, S, hidden), q.dtype),
        grid_spec=pltpu.PrefetchScalarGridSpec(
            num_scalar_prefetch=1,
            grid=grid,
            in_specs=[
                pl.BlockSpec((1, 1, tq, hd),
                             lambda b, qi, h, ki, qo: (b, h, qi, 0)),
                pl.BlockSpec((1, 1, tkv, hd),
                             lambda b, qi, h, ki, qo: (b, h // g, ki, 0)),
                pl.BlockSpec((1, 1, tkv, hd),
                             lambda b, qi, h, ki, qo: (b, h // g, ki, 0)),
                pl.BlockSpec((hd, hidden),
                             lambda b, qi, h, ki, qo: (h, 0)),
            ],
            out_specs=pl.BlockSpec((1, tq, hidden),
                                   lambda b, qi, h, ki, qo: (b, qi, 0)),
            scratch_shapes=[
                pltpu.VMEM((tq, 1), jnp.float32),        # m
                pltpu.VMEM((tq, 1), jnp.float32),        # l
                pltpu.VMEM((tq, hd), jnp.float32),       # per-head acc
                pltpu.VMEM((tq, hidden), jnp.float32),   # o_proj accumulator
            ],
        ),
        compiler_params=pltpu.CompilerParams(
            dimension_semantics=("parallel", "parallel",
                                 "arbitrary", "arbitrary"),
            vmem_limit_bytes=vmem_limit_bytes),
    )(qoff, q, k, v, wo_t)


# --------------------------------------------------------------------------
# Forward pass (mirrors LlamaAttentionFused.forward for seqlen > 1)
# --------------------------------------------------------------------------


def llama_attention_fused_forward(params, cache_k, cache_v, x, start_pos,
                                  cos, sin, mask=None, chunk_prefilling=False,
                                  *, qkv_block_m=256, qkv_block_k=512,
                                  attn_block_q=256, attn_block_kv=512,
                                  vmem_limit_bytes=None):
    del mask  # causal mask is regenerated in-kernel from start_pos (see TODO).
    B, S, H = x.shape
    nH = params['num_heads']
    nKV = params['num_kv_heads']
    hd = params['head_dim']

    if S == 1:
        # TODO(synk): decode path uses a fused CUDA kernel in the original.
        raise NotImplementedError("seqlen == 1 decode path not implemented")

    # Half-width RoPE tables (cos/sin of the per-position angles), replicated
    # per batch row so the flattened (B*S, .) m-tiling needs no batch alignment.
    cos_full = jnp.tile(cos.astype(jnp.float32), (B, 1))      # (B*S, hd//2)
    sin_full = jnp.tile(sin.astype(jnp.float32), (B, 1))      # (B*S, hd//2)

    x2d = x.reshape(B * S, H)
    q2d, k2d, v2d = _qkv_rope(x2d, params['wqkv_t'], cos_full, sin_full,
                              nH, nKV, hd, qkv_block_m, qkv_block_k,
                              vmem_limit_bytes)

    # q already carries the 1/sqrt(hd) score scale.
    xq = q2d.reshape(B, S, nH, hd).transpose(0, 2, 1, 3)     # (B, nH, S, hd)
    xk = k2d.reshape(B, S, nKV, hd).transpose(0, 2, 1, 3)    # (B, nKV, S, hd)
    xv = v2d.reshape(B, S, nKV, hd).transpose(0, 2, 1, 3)

    # KV cache kept lane-dense as (B, nKV, max_seq, hd); only the new chunk is
    # written (the torch (B,nKV,hd//8,S,8) packing is CUDA-kernel specific).
    cache_k = lax.dynamic_update_slice(cache_k, xk.astype(cache_k.dtype),
                                       (0, 0, start_pos, 0))
    cache_v = lax.dynamic_update_slice(cache_v, xv.astype(cache_v.dtype),
                                       (0, 0, start_pos, 0))

    if chunk_prefilling:
        # Attention reads the cache directly; the kv grid only covers the
        # first start_pos + S positions, the rest is never DMA'd.
        keys = cache_k if cache_k.dtype == x.dtype else cache_k.astype(x.dtype)
        values = cache_v if cache_v.dtype == x.dtype else cache_v.astype(x.dtype)
        kv_len = start_pos + S
        q_offset = start_pos
    else:
        keys, values = xk, xv
        kv_len = S
        q_offset = 0

    out = _flash_attention(xq, keys, values, params['wo_t'], q_offset, kv_len,
                           attn_block_q, attn_block_kv, vmem_limit_bytes)
    return out, cache_k, cache_v


# --------------------------------------------------------------------------
# Pure-JAX reference (mirrors the torch module math)
# --------------------------------------------------------------------------


def reference_forward(params, cache_k, cache_v, x, start_pos, cos, sin, mask,
                      chunk_prefilling):
    B, S, H = x.shape
    nH = params['num_heads']
    nKV = params['num_kv_heads']
    hd = params['head_dim']
    g = nH // nKV
    half = hd // 2

    xq = (x @ params['wq_t']).reshape(B, S, nH, hd)
    xk = (x @ params['wk_t']).reshape(B, S, nKV, hd)
    xv = (x @ params['wv_t']).reshape(B, S, nKV, hd)

    def rope(t):
        t1, t2 = t[..., :half], t[..., half:]
        c = cos[None, :, None, :]
        s = sin[None, :, None, :]
        return jnp.concatenate([t1 * c - t2 * s, t1 * s + t2 * c], axis=-1)

    xq = rope(xq)
    xk = rope(xk)

    k_store = jnp.transpose(xk, (0, 2, 1, 3))
    v_store = jnp.transpose(xv, (0, 2, 1, 3))
    cache_k = lax.dynamic_update_slice(cache_k, k_store, (0, 0, start_pos, 0))
    cache_v = lax.dynamic_update_slice(cache_v, v_store, (0, 0, start_pos, 0))

    if chunk_prefilling:
        L = start_pos + S
        keys = jnp.transpose(cache_k[:, :, :L, :], (0, 2, 1, 3))
        values = jnp.transpose(cache_v[:, :, :L, :], (0, 2, 1, 3))
    else:
        keys, values = xk, xv

    keys = jnp.repeat(keys, g, axis=2)
    values = jnp.repeat(values, g, axis=2)

    xq_t = jnp.transpose(xq, (0, 2, 1, 3))
    keys_t = jnp.transpose(keys, (0, 2, 1, 3))
    values_t = jnp.transpose(values, (0, 2, 1, 3))

    scores = jnp.einsum('bhqd,bhkd->bhqk', xq_t, keys_t) / math.sqrt(hd)
    if mask is not None:
        scores = scores + mask[None, None, :, :]
    p = jax.nn.softmax(scores.astype(jnp.float32), axis=-1)
    o = jnp.einsum('bhqk,bhkd->bhqd', p, values_t)
    o = jnp.transpose(o, (0, 2, 1, 3)).reshape(B, S, nH * hd)
    return o @ params['wo_t'], cache_k, cache_v


# --------------------------------------------------------------------------
# main
# --------------------------------------------------------------------------


if __name__ == "__main__":
    # Small config consistent with the module (head_dim = 128 as in Llama).
    B = 2
    nH = 2
    nKV = 1                      # GQA with group size 2
    hd = 128
    H = nH * hd                  # hidden_size = 256
    max_seq = 32                 # kv_max_seq_len
    theta = 10000.0

    key = jax.random.PRNGKey(0)
    kq, kk_, kv_, ko, kx1, kx2 = jax.random.split(key, 6)

    # nn.Linear weights are (out, in); store pre-transposed (in, out).
    wq = jax.random.normal(kq, (nH * hd, H), jnp.float32) * 0.05
    wk = jax.random.normal(kk_, (nKV * hd, H), jnp.float32) * 0.05
    wv = jax.random.normal(kv_, (nKV * hd, H), jnp.float32) * 0.05
    wo = jax.random.normal(ko, (H, nH * hd), jnp.float32) * 0.05

    params = dict(
        num_heads=nH, num_kv_heads=nKV, head_dim=hd,
        wq_t=wq.T, wk_t=wk.T, wv_t=wv.T, wo_t=wo.T,
        wqkv_t=jnp.concatenate([wq.T, wk.T, wv.T], axis=1),   # (H, Nq+2*Nkv)
    )

    cache_k = jnp.zeros((B, nKV, max_seq, hd), jnp.float32)
    cache_v = jnp.zeros((B, nKV, max_seq, hd), jnp.float32)

    def freqs(start, length):
        pos = jnp.arange(start, start + length, dtype=jnp.float32)
        inv = 1.0 / (theta ** (jnp.arange(0, hd, 2, dtype=jnp.float32) / hd))
        ang = jnp.outer(pos, inv)
        return jnp.cos(ang), jnp.sin(ang)

    # Small tiles so the test actually exercises multi-tile grids
    # (accumulation over k-tiles, online softmax over kv-tiles, causal skip).
    fwd = functools.partial(
        llama_attention_fused_forward,
        qkv_block_m=8, qkv_block_k=128, attn_block_q=8, attn_block_kv=8)

    # ---- chunk 1: plain prefill (chunk_prefilling=False), start_pos=0 ----
    S1 = 16
    x1 = jax.random.normal(kx1, (B, S1, H), jnp.float32)
    cos1, sin1 = freqs(0, S1)
    mask1 = jnp.where(jnp.arange(S1)[:, None] >= jnp.arange(S1)[None, :],
                      0.0, NEG_INF).astype(jnp.float32)

    out1, cache_k, cache_v = fwd(params, cache_k, cache_v, x1, 0, cos1, sin1,
                                 mask1, chunk_prefilling=False)
    jax.block_until_ready(out1)

    ref_ck = jnp.zeros_like(cache_k)
    ref_cv = jnp.zeros_like(cache_v)
    ref1, ref_ck, ref_cv = reference_forward(
        params, ref_ck, ref_cv, x1, 0, cos1, sin1, mask1, False)
    assert jnp.allclose(out1, ref1, rtol=1e-2, atol=1e-2)
    assert jnp.allclose(cache_k, ref_ck, rtol=1e-3, atol=1e-3)
    assert jnp.allclose(cache_v, ref_cv, rtol=1e-3, atol=1e-3)

    # ---- chunk 2: chunked prefill (chunk_prefilling=True), start_pos=S1 ----
    S2 = 8
    L = S1 + S2
    x2 = jax.random.normal(kx2, (B, S2, H), jnp.float32)
    cos2, sin2 = freqs(S1, S2)
    q_pos = S1 + jnp.arange(S2)[:, None]
    k_pos = jnp.arange(L)[None, :]
    mask2 = jnp.where(k_pos <= q_pos, 0.0, NEG_INF).astype(jnp.float32)

    out2, cache_k, cache_v = fwd(params, cache_k, cache_v, x2, S1, cos2, sin2,
                                 mask2, chunk_prefilling=True)
    jax.block_until_ready(out2)

    ref2, ref_ck, ref_cv = reference_forward(
        params, ref_ck, ref_cv, x2, S1, cos2, sin2, mask2, True)
    assert jnp.allclose(out2, ref2, rtol=1e-2, atol=1e-2)
    assert jnp.allclose(cache_k, ref_ck, rtol=1e-3, atol=1e-3)
    assert jnp.allclose(cache_v, ref_cv, rtol=1e-3, atol=1e-3)

    # ---- bf16 smoke run (production dtype: bf16 MXU operands, f32 accum) ----
    params_bf16 = dict(params)
    for name in ('wq_t', 'wk_t', 'wv_t', 'wo_t', 'wqkv_t'):
        params_bf16[name] = params[name].astype(jnp.bfloat16)
    fwd16 = functools.partial(
        llama_attention_fused_forward,
        qkv_block_m=16, qkv_block_k=128, attn_block_q=16, attn_block_kv=16)
    out_b, _, _ = fwd16(params_bf16,
                        jnp.zeros((B, nKV, max_seq, hd), jnp.bfloat16),
                        jnp.zeros((B, nKV, max_seq, hd), jnp.bfloat16),
                        x1.astype(jnp.bfloat16), 0, cos1, sin1, mask1,
                        chunk_prefilling=False)
    jax.block_until_ready(out_b)
    assert out_b.dtype == jnp.bfloat16
    assert bool(jnp.all(jnp.isfinite(out_b.astype(jnp.float32))))

    print("KERNEL_OK")
</pallas_src>

<mosaic_0001>
module attributes {stable_mosaic.version = 11 : i64} {
  func.func @_qkv_rope_kernel(%arg0: i32, %arg1: i32, %arg2: memref<8x128xf32, #tpu.memory_space<vmem>>, %arg3: memref<128x512xf32, #tpu.memory_space<vmem>>, %arg4: memref<8x64xf32, #tpu.memory_space<vmem>>, %arg5: memref<8x64xf32, #tpu.memory_space<vmem>>, %arg6: memref<8x256xf32, #tpu.memory_space<vmem>>, %arg7: memref<8x128xf32, #tpu.memory_space<vmem>>, %arg8: memref<8x128xf32, #tpu.memory_space<vmem>>, %arg9: memref<8x512xf32, #tpu.memory_space<vmem>>) attributes {dimension_semantics = [#tpu.dimension_semantics<parallel>, #tpu.dimension_semantics<arbitrary>], iteration_bounds = array<i64: 4, 2>, scalar_prefetch = 0 : i64, scratch_operands = 1 : i64, tpu.core_type = #tpu.core_type<tc>, window_params = [{transform_indices = @transform_0, window_bounds = array<i64: 8, 128>}, {transform_indices = @transform_1, window_bounds = array<i64: 128, 512>}, {transform_indices = @transform_2, window_bounds = array<i64: 8, 64>}, {transform_indices = @transform_3, window_bounds = array<i64: 8, 64>}, {transform_indices = @transform_4, window_bounds = array<i64: 8, 256>}, {transform_indices = @transform_5, window_bounds = array<i64: 8, 128>}, {transform_indices = @transform_6, window_bounds = array<i64: 8, 128>}]} {
    %c0_i32 = arith.constant 0 : i32
    %0 = arith.cmpi eq, %arg1, %c0_i32 : i32
    %1 = arith.extui %0 : i1 to i32
    %c0_i32_0 = arith.constant 0 : i32
    %2 = arith.cmpi ne, %1, %c0_i32_0 : i32
    scf.if %2 {
      %cst_9 = arith.constant 0.000000e+00 : f32
      %12 = vector.broadcast %cst_9 : f32 to vector<8x512xf32>
      %c0_10 = arith.constant 0 : index
      %c0_11 = arith.constant 0 : index
      %13 = vector.load %arg9[%c0_10, %c0_11] : memref<8x512xf32, #tpu.memory_space<vmem>>, vector<8x512xf32>
      tpu.vector_store %arg9[%c0_10, %c0_11], %12 {strides = array<i32>} : memref<8x512xf32, #tpu.memory_space<vmem>>, vector<8x512xf32>,
    } else {
    }
    %c0 = arith.constant 0 : index
    %c0_1 = arith.constant 0 : index
    %3 = vector.load %arg9[%c0, %c0_1] : memref<8x512xf32, #tpu.memory_space<vmem>>, vector<8x512xf32>
    %c0_2 = arith.constant 0 : index
    %c0_3 = arith.constant 0 : index
    %4 = vector.load %arg2[%c0_2, %c0_3] : memref<8x128xf32, #tpu.memory_space<vmem>>, vector<8x128xf32>
    %c0_4 = arith.constant 0 : index
    %c0_5 = arith.constant 0 : index
    %5 = vector.load %arg3[%c0_4, %c0_5] : memref<128x512xf32, #tpu.memory_space<vmem>>, vector<128x512xf32>
    %cst = arith.constant dense<0.000000e+00> : vector<8x512xf32>
    %6 = tpu.matmul %4, %5, %cst {dimension_numbers = #tpu.dot_dimension_numbers<[1], [0], [0], [1], [0, 0, 1, 1], [], []>} : vector<8x128xf32>, vector<128x512xf32>, vector<8x512xf32> -> vector<8x512xf32>
    %7 = arith.addf %3, %6 : vector<8x512xf32>
    %c0_6 = arith.constant 0 : index
    %c0_7 = arith.constant 0 : index
    %8 = vector.load %arg9[%c0_6, %c0_7] : memref<8x512xf32, #tpu.memory_space<vmem>>, vector<8x512xf32>
    tpu.vector_store %arg9[%c0_6, %c0_7], %7 {strides = array<i32>} : memref<8x512xf32, #tpu.memory_space<vmem>>, vector<8x512xf32>,
    %c1_i32 = arith.constant 1 : i32
    %9 = arith.cmpi eq, %arg1, %c1_i32 : i32
    %10 = arith.extui %9 : i1 to i32
    %c0_i32_8 = arith.constant 0 : i32
    %11 = arith.cmpi ne, %10, %c0_i32_8 : i32
    scf.if %11 {
      %c0_9 = arith.constant 0 : index
      %c0_10 = arith.constant 0 : index
      %12 = vector.load %arg9[%c0_9, %c0_10] : memref<8x512xf32, #tpu.memory_space<vmem>>, vector<8x512xf32>
      %c0_11 = arith.constant 0 : index
      %c0_12 = arith.constant 0 : index
      %13 = vector.load %arg4[%c0_11, %c0_12] : memref<8x64xf32, #tpu.memory_space<vmem>>, vector<8x64xf32>
      %14 = vector.shape_cast %13 : vector<8x64xf32> to vector<8x1x64xf32>
      %c0_13 = arith.constant 0 : index
      %c0_14 = arith.constant 0 : index
      %15 = vector.load %arg5[%c0_13, %c0_14] : memref<8x64xf32, #tpu.memory_space<vmem>>, vector<8x64xf32>
      %16 = vector.shape_cast %15 : vector<8x64xf32> to vector<8x1x64xf32>
      %17 = vector.extract_strided_slice %12 {offsets = [0, 0], sizes = [8, 256], strides = [1, 1]} : vector<8x512xf32> to vector<8x256xf32>
      %18 = vector.shape_cast %17 : vector<8x256xf32> to vector<8x2x128xf32>
      %19 = vector.extract_strided_slice %18 {offsets = [0, 0, 0], sizes = [8, 2, 64], strides = [1, 1, 1]} : vector<8x2x128xf32> to vector<8x2x64xf32>
      %20 = vector.extract_strided_slice %18 {offsets = [0, 0, 64], sizes = [8, 2, 64], strides = [1, 1, 1]} : vector<8x2x128xf32> to vector<8x2x64xf32>
      %21 = vector.broadcast %14 : vector<8x1x64xf32> to vector<8x2x64xf32>
      %22 = arith.mulf %19, %21 : vector<8x2x64xf32>
      %23 = vector.broadcast %16 : vector<8x1x64xf32> to vector<8x2x64xf32>
      %24 = arith.mulf %20, %23 : vector<8x2x64xf32>
      %25 = arith.subf %22, %24 : vector<8x2x64xf32>
      %26 = vector.broadcast %16 : vector<8x1x64xf32> to vector<8x2x64xf32>
      %27 = arith.mulf %19, %26 : vector<8x2x64xf32>
      %28 = vector.broadcast %14 : vector<8x1x64xf32> to vector<8x2x64xf32>
      %29 = arith.mulf %20, %28 : vector<8x2x64xf32>
      %30 = arith.addf %27, %29 : vector<8x2x64xf32>
      %31 = tpu.concatenate %25, %30 in 2 : vector<8x2x64xf32>, vector<8x2x64xf32> -> vector<8x2x128xf32>
      %32 = vector.shape_cast %31 : vector<8x2x128xf32> to vector<8x256xf32>
      %cst_15 = arith.constant 0.0883883461 : f32
      %33 = vector.broadcast %cst_15 : f32 to vector<8x256xf32>
      %34 = arith.mulf %32, %33 : vector<8x256xf32>
      %35 = vector.extract_strided_slice %12 {offsets = [0, 256], sizes = [8, 128], strides = [1, 1]} : vector<8x512xf32> to vector<8x128xf32>
      %36 = vector.shape_cast %35 : vector<8x128xf32> to vector<8x1x128xf32>
      %37 = vector.extract_strided_slice %36 {offsets = [0, 0, 0], sizes = [8, 1, 64], strides = [1, 1, 1]} : vector<8x1x128xf32> to vector<8x1x64xf32>
      %38 = vector.extract_strided_slice %36 {offsets = [0, 0, 64], sizes = [8, 1, 64], strides = [1, 1, 1]} : vector<8x1x128xf32> to vector<8x1x64xf32>
      %39 = arith.mulf %37, %14 : vector<8x1x64xf32>
      %40 = arith.mulf %38, %16 : vector<8x1x64xf32>
      %41 = arith.subf %39, %40 : vector<8x1x64xf32>
      %42 = arith.mulf %37, %16 : vector<8x1x64xf32>
      %43 = arith.mulf %38, %14 : vector<8x1x64xf32>
      %44 = arith.addf %42, %43 : vector<8x1x64xf32>
      %45 = tpu.concatenate %41, %44 in 2 : vector<8x1x64xf32>, vector<8x1x64xf32> -> vector<8x1x128xf32>
      %46 = vector.shape_cast %45 : vector<8x1x128xf32> to vector<8x128xf32>
      %47 = vector.extract_strided_slice %12 {offsets = [0, 384], sizes = [8, 128], strides = [1, 1]} : vector<8x512xf32> to vector<8x128xf32>
      %c0_16 = arith.constant 0 : index
      %c0_17 = arith.constant 0 : index
      %48 = vector.load %arg6[%c0_16, %c0_17] : memref<8x256xf32, #tpu.memory_space<vmem>>, vector<8x256xf32>
      tpu.vector_store %arg6[%c0_16, %c0_17], %34 {strides = array<i32>} : memref<8x256xf32, #tpu.memory_space<vmem>>, vector<8x256xf32>,
      %c0_18 = arith.constant 0 : index
      %c0_19 = arith.constant 0 : index
      %49 = vector.load %arg7[%c0_18, %c0_19] : memref<8x128xf32, #tpu.memory_space<vmem>>, vector<8x128xf32>
      tpu.vector_store %arg7[%c0_18, %c0_19], %46 {strides = array<i32>} : memref<8x128xf32, #tpu.memory_space<vmem>>, vector<8x128xf32>,
      %c0_20 = arith.constant 0 : index
      %c0_21 = arith.constant 0 : index
      %50 = vector.load %arg8[%c0_20, %c0_21] : memref<8x128xf32, #tpu.memory_space<vmem>>, vector<8x128xf32>
      tpu.vector_store %arg8[%c0_20, %c0_21], %47 {strides = array<i32>} : memref<8x128xf32, #tpu.memory_space<vmem>>, vector<8x128xf32>,
    } else {
    }
    return
  }
  func.func @transform_0(%arg0: i32, %arg1: i32) -> (i32, i32) {
    %c0_i32 = arith.constant 0 : i32
    return %arg0, %arg1 : i32, i32
  }
  func.func @transform_1(%arg0: i32, %arg1: i32) -> (i32, i32) {
    %c0_i32 = arith.constant 0 : i32
    %c0_i32_0 = arith.constant 0 : i32
    return %arg1, %c0_i32 : i32, i32
  }
  func.func @transform_2(%arg0: i32, %arg1: i32) -> (i32, i32) {
    %c0_i32 = arith.constant 0 : i32
    %c0_i32_0 = arith.constant 0 : i32
    return %arg0, %c0_i32 : i32, i32
  }
  func.func @transform_3(%arg0: i32, %arg1: i32) -> (i32, i32) {
    %c0_i32 = arith.constant 0 : i32
    %c0_i32_0 = arith.constant 0 : i32
    return %arg0, %c0_i32 : i32, i32
  }
  func.func @transform_4(%arg0: i32, %arg1: i32) -> (i32, i32) {
    %c0_i32 = arith.constant 0 : i32
    %c0_i32_0 = arith.constant 0 : i32
    return %arg0, %c0_i32 : i32, i32
  }
  func.func @transform_5(%arg0: i32, %arg1: i32) -> (i32, i32) {
    %c0_i32 = arith.constant 0 : i32
    %c0_i32_0 = arith.constant 0 : i32
    return %arg0, %c0_i32 : i32, i32
  }
  func.func @transform_6(%arg0: i32, %arg1: i32) -> (i32, i32) {
    %c0_i32 = arith.constant 0 : i32
    %c0_i32_0 = arith.constant 0 : i32
    return %arg0, %c0_i32 : i32, i32
  }
}

</mosaic_0001>

<llo_original>
// kernel: tpu_custom_call.1
$region0: #{tpu_custom_call.1}
  #allocation0 [shape = 'u32[]', space=smem, size = 0x4, offset = 0x4, fixed_abs, tag = 'smem constant byte address 0x4 - core index']
  #allocation1 [shape = 'u32[144,128]{1,0:T(1,128)}', space=vmem, size = 0x12000, scoped, tag = 'internal scratch']
  #allocation2 [shape = 'f32[8,512]{1,0:T(8,128)}', space=vmem, size = 0x4000, scoped, tag = 'scratch operand']
  %s0 = inlined_call_operand.hbm [shape: f32[32,256], index: 0, kind: input, shape index: {}]
  %s1 = inlined_call_operand.hbm [shape: f32[256,512], index: 1, kind: input, shape index: {}]
  %s2 = inlined_call_operand.hbm [shape: f32[32,64], index: 2, kind: input, shape index: {}]
  %s3 = inlined_call_operand.hbm [shape: f32[32,64], index: 3, kind: input, shape index: {}]
  %s4 = inlined_call_operand.hbm [shape: f32[32,256], index: 4, kind: output, shape index: {0}]
  %s5 = inlined_call_operand.hbm [shape: f32[32,128], index: 5, kind: output, shape index: {1}]
  %s6 = inlined_call_operand.hbm [shape: f32[32,128], index: 6, kind: output, shape index: {2}]
  %7 = xla_tuple %s4, %s5, %s6
  %s8 = sld [smem:[#allocation0]]
  $region89: #{tpu_custom_call.1} parent=0
    _
  %s10 = ssub.s32 1, %s8
  %s11 = scalar_select 0, %s10, %s8
  $region1: #{tpu_custom_call.1} parent=0
    #allocation3 [shape = 'u8[8192]{0}', space=vmem, size = 0x2000, scoped, tag = 'input window, operand 0']
    #allocation4 [shape = 's32[2]{0}', space=sflag, size = 0x8, scoped, tag = 'scoped memory for tpu_custom_call.1']
    #allocation5 [shape = 's32[2]{0}', space=sflag, size = 0x8, scoped, tag = 'scoped memory for tpu_custom_call.1']
    #allocation6 [shape = 'u8[524288]{0}', space=vmem, size = 0x80000, scoped, tag = 'input window, operand 1']
    #allocation7 [shape = 's32[2]{0}', space=sflag, size = 0x8, scoped, tag = 'scoped memory for tpu_custom_call.1']
    #allocation8 [shape = 'u8[8192]{0}', space=vmem, size = 0x2000, scoped, tag = 'input window, operand 2']
    #allocation9 [shape = 'u8[8192]{0}', space=vmem, size = 0x2000, scoped, tag = 'input window, operand 3']
    #allocation10 [shape = 's32[2]{0}', space=sflag, size = 0x8, scoped, tag = 'scoped memory for tpu_custom_call.1']
    #allocation11 [shape = 'u8[16384]{0}', space=vmem, size = 0x4000, scoped, tag = 'output window, operand 0']
    #allocation12 [shape = 'u8[8192]{0}', space=vmem, size = 0x2000, scoped, tag = 'output window, operand 1']
    #allocation13 [shape = 's32[2]{0}', space=sflag, size = 0x8, scoped, tag = 'scoped memory for tpu_custom_call.1']
    #allocation14 [shape = 'u8[8192]{0}', space=vmem, size = 0x2000, scoped, tag = 'output window, operand 2']
    %12 = vsyncpa [#allocation4], 0
    %s13 = scalar_lea.sflag [#allocation4], 1
    %14 = vsyncpa %s13, 0
    %15 = vsyncpa [#allocation7], 0
    %s16 = scalar_lea.sflag [#allocation7], 1
    %17 = vsyncpa %s16, 0
    %18 = vsyncpa [#allocation10], 0
    %s19 = scalar_lea.sflag [#allocation10], 1
    %20 = vsyncpa %s19, 0
    %21 = vsyncpa [#allocation5], 0
    %s22 = scalar_lea.sflag [#allocation5], 1
    %23 = vsyncpa %s22, 0
    %24 = vsyncpa [#allocation13], 0
    %s25 = scalar_lea.sflag [#allocation13], 1
    %26 = vsyncpa %s25, 0
    loop: start=0, step=1, limit=10
    $region2: #{tpu_custom_call.1} parent=1 // loop_pre_header
      _
    $region3: #{tpu_custom_call.1} parent=1 // loop_header
      %s28 = sphi 0, %s32
      %p29 = scmp.ge.s32.totalorder %s28, 10
      %s35 = sphi 0, %s47
      %s36 = sphi 0, %s43
      %s37 = sphi 0, %s35
      %s38 = sphi 0, %s36
      %s39 = sphi 0, %s37
      %s40 = sphi 0, %s38
      %s52 = sphi 0, %s54
      %s55 = sphi 0, %s52
      %s56 = sphi 0, %s55
      %s72 = sphi 0, %s56
      %s78 = sphi 0, %s80
      %s81 = sphi 0, %s78
      %s82 = sphi 0, %s81
      %s98 = sphi 0, %s82
      %s104 = sphi 0, %s106
      %s107 = sphi 0, %s104
      %s108 = sphi 0, %s107
      %s124 = sphi 0, %s108
      %s130 = sphi 0, %s132
      %s133 = sphi 0, %s130
      %s134 = sphi 0, %s133
      %s150 = sphi 0, %s134
      %s156 = sphi 0, %s158
      %s159 = sphi 0, %s156
      %s160 = sphi 0, %s159
      %s176 = sphi 0, %s160
      %s182 = sphi 0, %s184
      %s185 = sphi 0, %s182
      %s186 = sphi 0, %s185
      %s202 = sphi 0, %s186
      %s208 = sphi 0, %s210
      %s211 = sphi 0, %s208
      %s212 = sphi 0, %s211
      %s228 = sphi 0, %s212
    $region4: #{tpu_custom_call.1} parent=1 // loop_header_branch
      %31 = sbr.rel (%p29) target = $region8
    $region5: #{tpu_custom_call.1} parent=1 // loop_body
      %s33 = ssub.s32 %s28, 1
      %s34 = ssub.s32 %s28, 2
      %s41 = sadd.s32 1, %s36
      %p42 = scmp.ge.s32.totalorder %s41, 2
      %s43 = scalar_select %p42, 0, %s41
      %s44 = sadd.s32 1, %s35
      %s45 = scalar_select %p42, %s44, %s35
      %p46 = scmp.ge.s32.totalorder %s45, 4
      %s47 = scalar_select %p46, 0, %s45
      %s48 = ssub.s32 %s35, %s47
      %s49 = ssub.s32 %s36, %s43
      %s50 = sor.u32 %s48, %s49
      %p51 = scmp.eq.s32.totalorder %s50, 0
      %s53 = sadd.s32 %s52, 1
      %s54 = scalar_select %p51, %s52, %s53
      %p57 = pneg %p51
      %p58 = scmp.eq.s32.totalorder %s28, 7
      %p59 = por %p57, %p58
      %p60 = scmp.ne.s32.totalorder %s52, %s55
      %p61 = scmp.eq.s32.totalorder %s28, 0
      %p62 = por %p60, %p61
      %p63 = scmp.ne.s32.totalorder %s52, %s55
      %p64 = scmp.eq.s32.totalorder %s33, 7
      %p65 = por %p63, %p64
      %p66 = scmp.ne.s32.totalorder %s55, %s56
      %p67 = scmp.eq.s32.totalorder %s33, 0
      %p68 = por %p66, %p67
      %p69 = scmp.ne.s32.totalorder %s55, %s56
      %p70 = scmp.eq.s32.totalorder %s34, 7
      %p71 = por %p69, %p70
      %p73 = scmp.ne.s32.totalorder %s56, %s72
      %p74 = scmp.eq.s32.totalorder %s34, 0
      %p75 = por %p73, %p74
      %s76 = ssub.s32 %s36, %s43
      %p77 = scmp.eq.s32.totalorder %s76, 0
      %s79 = sadd.s32 %s78, 1
      %s80 = scalar_select %p77, %s78, %s79
      %p83 = pneg %p77
      %p84 = scmp.eq.s32.totalorder %s28, 7
      %p85 = por %p83, %p84
      %p86 = scmp.ne.s32.totalorder %s78, %s81
      %p87 = scmp.eq.s32.totalorder %s28, 0
      %p88 = por %p86, %p87
      %p89 = scmp.ne.s32.totalorder %s78, %s81
      %p90 = scmp.eq.s32.totalorder %s33, 7
      %p91 = por %p89, %p90
      %p92 = scmp.ne.s32.totalorder %s81, %s82
      %p93 = scmp.eq.s32.totalorder %s33, 0
      %p94 = por %p92, %p93
      %p95 = scmp.ne.s32.totalorder %s81, %s82
      %p96 = scmp.eq.s32.totalorder %s34, 7
      %p97 = por %p95, %p96
      %p99 = scmp.ne.s32.totalorder %s82, %s98
      %p100 = scmp.eq.s32.totalorder %s34, 0
      %p101 = por %p99, %p100
      %s102 = ssub.s32 %s35, %s47
      %p103 = scmp.eq.s32.totalorder %s102, 0
      %s105 = sadd.s32 %s104, 1
      %s106 = scalar_select %p103, %s104, %s105
      %p109 = pneg %p103
      %p110 = scmp.eq.s32.totalorder %s28, 7
      %p111 = por %p109, %p110
      %p112 = scmp.ne.s32.totalorder %s104, %s107
      %p113 = scmp.eq.s32.totalorder %s28, 0
      %p114 = por %p112, %p113
      %p115 = scmp.ne.s32.totalorder %s104, %s107
      %p116 = scmp.eq.s32.totalorder %s33, 7
      %p117 = por %p115, %p116
      %p118 = scmp.ne.s32.totalorder %s107, %s108
      %p119 = scmp.eq.s32.totalorder %s33, 0
      %p120 = por %p118, %p119
      %p121 = scmp.ne.s32.totalorder %s107, %s108
      %p122 = scmp.eq.s32.totalorder %s34, 7
      %p123 = por %p121, %p122
      %p125 = scmp.ne.s32.totalorder %s108, %s124
      %p126 = scmp.eq.s32.totalorder %s34, 0
      %p127 = por %p125, %p126
      %s128 = ssub.s32 %s35, %s47
      %p129 = scmp.eq.s32.totalorder %s128, 0
      %s131 = sadd.s32 %s130, 1
      %s132 = scalar_select %p129, %s130, %s131
      %p135 = pneg %p129
      %p136 = scmp.eq.s32.totalorder %s28, 7
      %p137 = por %p135, %p136
      %p138 = scmp.ne.s32.totalorder %s130, %s133
      %p139 = scmp.eq.s32.totalorder %s28, 0
      %p140 = por %p138, %p139
      %p141 = scmp.ne.s32.totalorder %s130, %s133
      %p142 = scmp.eq.s32.totalorder %s33, 7
      %p143 = por %p141, %p142
      %p144 = scmp.ne.s32.totalorder %s133, %s134
      %p145 = scmp.eq.s32.totalorder %s33, 0
      %p146 = por %p144, %p145
      %p147 = scmp.ne.s32.totalorder %s133, %s134
      %p148 = scmp.eq.s32.totalorder %s34, 7
      %p149 = por %p147, %p148
      %p151 = scmp.ne.s32.totalorder %s134, %s150
      %p152 = scmp.eq.s32.totalorder %s34, 0
      %p153 = por %p151, %p152
      %s154 = ssub.s32 %s35, %s47
      %p155 = scmp.eq.s32.totalorder %s154, 0
      %s157 = sadd.s32 %s156, 1
      %s158 = scalar_select %p155, %s156, %s157
      %p161 = pneg %p155
      %p162 = scmp.eq.s32.totalorder %s28, 7
      %p163 = por %p161, %p162
      %p164 = scmp.ne.s32.totalorder %s156, %s159
      %p165 = scmp.eq.s32.totalorder %s28, 0
      %p166 = por %p164, %p165
      %p167 = scmp.ne.s32.totalorder %s156, %s159
      %p168 = scmp.eq.s32.totalorder %s33, 7
      %p169 = por %p167, %p168
      %p170 = scmp.ne.s32.totalorder %s159, %s160
      %p171 = scmp.eq.s32.totalorder %s33, 0
      %p172 = por %p170, %p171
      %p173 = scmp.ne.s32.totalorder %s159, %s160
      %p174 = scmp.eq.s32.totalorder %s34, 7
      %p175 = por %p173, %p174
      %p177 = scmp.ne.s32.totalorder %s160, %s176
      %p178 = scmp.eq.s32.totalorder %s34, 0
      %p179 = por %p177, %p178
      %s180 = ssub.s32 %s35, %s47
      %p181 = scmp.eq.s32.totalorder %s180, 0
      %s183 = sadd.s32 %s182, 1
      %s184 = scalar_select %p181, %s182, %s183
      %p187 = pneg %p181
      %p188 = scmp.eq.s32.totalorder %s28, 7
      %p189 = por %p187, %p188
      %p190 = scmp.ne.s32.totalorder %s182, %s185
      %p191 = scmp.eq.s32.totalorder %s28, 0
      %p192 = por %p190, %p191
      %p193 = scmp.ne.s32.totalorder %s182, %s185
      %p194 = scmp.eq.s32.totalorder %s33, 7
      %p195 = por %p193, %p194
      %p196 = scmp.ne.s32.totalorder %s185, %s186
      %p197 = scmp.eq.s32.totalorder %s33, 0
      %p198 = por %p196, %p197
      %p199 = scmp.ne.s32.totalorder %s185, %s186
      %p200 = scmp.eq.s32.totalorder %s34, 7
      %p201 = por %p199, %p200
      %p203 = scmp.ne.s32.totalorder %s186, %s202
      %p204 = scmp.eq.s32.totalorder %s34, 0
      %p205 = por %p203, %p204
      %s206 = ssub.s32 %s35, %s47
      %p207 = scmp.eq.s32.totalorder %s206, 0
      %s209 = sadd.s32 %s208, 1
      %s210 = scalar_select %p207, %s208, %s209
      %p213 = pneg %p207
      %p214 = scmp.eq.s32.totalorder %s28, 7
      %p215 = por %p213, %p214
      %p216 = scmp.ne.s32.totalorder %s208, %s211
      %p217 = scmp.eq.s32.totalorder %s28, 0
      %p218 = por %p216, %p217
      %p219 = scmp.ne.s32.totalorder %s208, %s211
      %p220 = scmp.eq.s32.totalorder %s33, 7
      %p221 = por %p219, %p220
      %p222 = scmp.ne.s32.totalorder %s211, %s212
      %p223 = scmp.eq.s32.totalorder %s33, 0
      %p224 = por %p222, %p223
      %p225 = scmp.ne.s32.totalorder %s211, %s212
      %p226 = scmp.eq.s32.totalorder %s34, 7
      %p227 = por %p225, %p226
      %p229 = scmp.ne.s32.totalorder %s212, %s228
      %p230 = scmp.eq.s32.totalorder %s34, 0
      %p231 = por %p229, %p230
      %p232 = scmp.le.s32.totalorder 1, %s28
      %p233 = scmp.lt.s32.totalorder %s28, 9
      %p234 = pnand %p232, %p233
      %p235 = pneg %p234
      // Predicated region
      $region9: #{tpu_custom_call.1} parent=5 // pred_check
        _
      $region10: #{tpu_custom_call.1} parent=5 // pred_check_branch
        %237 = sbr.rel (%p234) target = $region12
      $region11: #{tpu_custom_call.1} parent=5 // pred_region
        %s238 = ssub.s32 %s28, 1
      $region12: #{tpu_custom_call.1} parent=5 // pred_fallthru
        _
      %p239 = scmp.lt.s32.totalorder %s28, 8
      // Predicated region
      $region13: #{tpu_custom_call.1} parent=5 // pred_check
        %p240 = pneg %p239
      $region14: #{tpu_custom_call.1} parent=5 // pred_check_branch
        %242 = sbr.rel (%p240) target = $region16
      $region15: #{tpu_custom_call.1} parent=5 // pred_region
        // Predicated region
        $region17: #{tpu_custom_call.1} parent=15 // pred_check
          %p243 = pneg %p62
        $region18: #{tpu_custom_call.1} parent=15 // pred_check_branch
          %245 = sbr.rel (%p243) target = $region20
        $region19: #{tpu_custom_call.1} parent=15 // pred_region
          %s246 = sand.u32 %s52, 1
          %s247 = scalar_lea.sflag [#allocation4], %s246
          %s248 = sand.u32 %s52, 1
          %s249 = smul.addr %s248, 8
          %s250 = scalar_lea.vmem [#allocation3], %s249
          %s252 = ssub.s32 128, 128
          %253 = vsyncadd %s247, %s252
          %s254 = smul.addr %s35, 2
          %s255 = sadd.s32 %s36, %s254
          %s256 = smul.addr %s255, 128
          %s257 = scalar_lea.hbm %s0, %s256
          %s259 = sshll.u32 %s250, 4
          %s260 = int_to_ptr.vmem [resolvable:$true] %s259
          %262 = dma.hbm_to_vmem [thread:$0]  %s257, 128, %s260, %s247
        $region20: #{tpu_custom_call.1} parent=15 // pred_fallthru
          _
        // Predicated region
        $region21: #{tpu_custom_call.1} parent=15 // pred_check
          %p263 = pneg %p88
        $region22: #{tpu_custom_call.1} parent=15 // pred_check_branch
          %265 = sbr.rel (%p263) target = $region24
        $region23: #{tpu_custom_call.1} parent=15 // pred_region
          %s266 = sand.u32 %s28, 1
          %s267 = scalar_lea.sflag [#allocation7], %s266
          %s268 = sand.u32 %s78, 1
          %s269 = smul.addr %s268, 512
          %s270 = scalar_lea.vmem [#allocation6], %s269
          %s271 = smul.u32 16, %s36
          %s273 = ssub.s32 8192, 8192
          %274 = vsyncadd %s267, %s273
          %s275 = smul.addr %s271, 4
          %s276 = smul.addr %s275, 128
          %s277 = scalar_lea.hbm %s1, %s276
          %s278 = sshll.u32 %s270, 4
          %s279 = int_to_ptr.vmem [resolvable:$true] %s278
          %284 = dma.hbm_to_vmem [thread:$0]  %s277, 8192, %s279, %s267, 512, 512, 32
        $region24: #{tpu_custom_call.1} parent=15 // pred_fallthru
          _
        // Predicated region
        $region25: #{tpu_custom_call.1} parent=15 // pred_check
          %p285 = pneg %p114
        $region26: #{tpu_custom_call.1} parent=15 // pred_check_branch
          %287 = sbr.rel (%p285) target = $region28
        $region27: #{tpu_custom_call.1} parent=15 // pred_region
          %s288 = sand.u32 %s28, 1
          %s289 = scalar_lea.sflag [#allocation7], %s288
          %s290 = sand.u32 %s104, 1
          %s291 = smul.addr %s290, 8
          %s292 = scalar_lea.vmem [#allocation8], %s291
          %s294 = ssub.s32 128, 128
          %295 = vsyncadd %s289, %s294
          %s296 = smul.addr %s35, 128
          %s297 = scalar_lea.hbm %s2, %s296
          %s299 = sshll.u32 %s292, 4
          %s300 = int_to_ptr.vmem [resolvable:$true] %s299
          %302 = dma.hbm_to_vmem [thread:$0]  %s297, 128, %s300, %s289
        $region28: #{tpu_custom_call.1} parent=15 // pred_fallthru
          _
        // Predicated region
        $region29: #{tpu_custom_call.1} parent=15 // pred_check
          %p303 = pneg %p140
        $region30: #{tpu_custom_call.1} parent=15 // pred_check_branch
          %305 = sbr.rel (%p303) target = $region32
        $region31: #{tpu_custom_call.1} parent=15 // pred_region
          %s306 = sand.u32 %s130, 1
          %s307 = scalar_lea.sflag [#allocation10], %s306
          %s308 = sand.u32 %s130, 1
          %s309 = smul.addr %s308, 8
          %s310 = scalar_lea.vmem [#allocation9], %s309
          %s312 = ssub.s32 128, 128
          %313 = vsyncadd %s307, %s312
          %s314 = smul.addr %s35, 128
          %s315 = scalar_lea.hbm %s3, %s314
          %s317 = sshll.u32 %s310, 4
          %s318 = int_to_ptr.vmem [resolvable:$true] %s317
          %320 = dma.hbm_to_vmem [thread:$0]  %s315, 128, %s318, %s307
        $region32: #{tpu_custom_call.1} parent=15 // pred_fallthru
          _
      $region16: #{tpu_custom_call.1} parent=5 // pred_fallthru
        _
      %p321 = scmp.le.s32.totalorder 1, %s28
      %p322 = scmp.lt.s32.totalorder %s28, 9
      %p323 = pnand %p321, %p322
      %p324 = pneg %p323
      // Predicated region
      $region33: #{tpu_custom_call.1} parent=5 // pred_check
        _
      $region34: #{tpu_custom_call.1} parent=5 // pred_check_branch
        %326 = sbr.rel (%p323) target = $region36
      $region35: #{tpu_custom_call.1} parent=5 // pred_region
        %s327 = ssub.s32 %s28, 1
        %s328 = sand.u32 %s55, 1
        %s329 = scalar_lea.sflag [#allocation4], %s328
        %s330 = sand.u32 %s55, 1
        %s331 = smul.addr %s330, 8
        %s332 = scalar_lea.vmem [#allocation3], %s331
        // Predicated region
        $region37: #{tpu_custom_call.1} parent=35 // pred_check
          %p333 = pneg %p68
        $region38: #{tpu_custom_call.1} parent=35 // pred_check_branch
          %335 = sbr.rel (%p333) target = $region40
        $region39: #{tpu_custom_call.1} parent=35 // pred_region
          %336 = dma.done %s329, 128
        $region40: #{tpu_custom_call.1} parent=35 // pred_fallthru
          _
        %s337 = sand.u32 %s33, 1
        %s338 = scalar_lea.sflag [#allocation7], %s337
        %s339 = sand.u32 %s81, 1
        %s340 = smul.addr %s339, 512
        %s341 = scalar_lea.vmem [#allocation6], %s340
        // Predicated region
        $region41: #{tpu_custom_call.1} parent=35 // pred_check
          %p342 = pneg %p94
        $region42: #{tpu_custom_call.1} parent=35 // pred_check_branch
          %344 = sbr.rel (%p342) target = $region44
        $region43: #{tpu_custom_call.1} parent=35 // pred_region
          %345 = dma.done %s338, 8192
        $region44: #{tpu_custom_call.1} parent=35 // pred_fallthru
          _
        %s346 = sand.u32 %s33, 1
        %s347 = scalar_lea.sflag [#allocation7], %s346
        %s348 = sand.u32 %s107, 1
        %s349 = smul.addr %s348, 8
        %s350 = scalar_lea.vmem [#allocation8], %s349
        // Predicated region
        $region45: #{tpu_custom_call.1} parent=35 // pred_check
          %p351 = pneg %p120
        $region46: #{tpu_custom_call.1} parent=35 // pred_check_branch
          %353 = sbr.rel (%p351) target = $region48
        $region47: #{tpu_custom_call.1} parent=35 // pred_region
          %354 = dma.done %s347, 128
        $region48: #{tpu_custom_call.1} parent=35 // pred_fallthru
          _
        %s355 = sand.u32 %s133, 1
        %s356 = scalar_lea.sflag [#allocation10], %s355
        %s357 = sand.u32 %s133, 1
        %s358 = smul.addr %s357, 8
        %s359 = scalar_lea.vmem [#allocation9], %s358
        // Predicated region
        $region49: #{tpu_custom_call.1} parent=35 // pred_check
          %p360 = pneg %p146
        $region50: #{tpu_custom_call.1} parent=35 // pred_check_branch
          %362 = sbr.rel (%p360) target = $region52
        $region51: #{tpu_custom_call.1} parent=35 // pred_region
          %363 = dma.done %s356, 128
        $region52: #{tpu_custom_call.1} parent=35 // pred_fallthru
          _
        %s364 = sand.u32 %s55, 1
        %s365 = scalar_lea.sflag [#allocation4], %s364
        %s366 = sand.u32 %s55, 1
        %s367 = smul.addr %s366, 8
        %s368 = scalar_lea.vmem [#allocation3], %s367
        %p369 = pneg %p68
        %p370 = pneg %p65
        %s371 = sand.u32 %s33, 1
        %s372 = scalar_lea.sflag [#allocation7], %s371
        %s373 = sand.u32 %s81, 1
        %s374 = smul.addr %s373, 512
        %s375 = scalar_lea.vmem [#allocation6], %s374
        %p376 = pneg %p94
        %p377 = pneg %p91
        %s378 = sand.u32 %s33, 1
        %s379 = scalar_lea.sflag [#allocation7], %s378
        %s380 = sand.u32 %s107, 1
        %s381 = smul.addr %s380, 8
        %s382 = scalar_lea.vmem [#allocation8], %s381
        %p383 = pneg %p120
        %p384 = pneg %p117
        %s385 = sand.u32 %s133, 1
        %s386 = scalar_lea.sflag [#allocation10], %s385
        %s387 = sand.u32 %s133, 1
        %s388 = smul.addr %s387, 8
        %s389 = scalar_lea.vmem [#allocation9], %s388
        %p390 = pneg %p146
        %p391 = pneg %p143
        %p392 = pneg %p172
        %p393 = pneg %p169
        %s394 = sand.u32 %s159, 1
        %s395 = scalar_lea.sflag [#allocation5], %s394
        %s396 = sand.u32 %s159, 1
        %s397 = smul.addr %s396, 16
        %s398 = scalar_lea.vmem [#allocation11], %s397
        %p399 = pneg %p198
        %p400 = pneg %p195
        %s401 = sand.u32 %s33, 1
        %s402 = scalar_lea.sflag [#allocation13], %s401
        %s403 = sand.u32 %s185, 1
        %s404 = smul.addr %s403, 8
        %s405 = scalar_lea.vmem [#allocation12], %s404
        %p406 = pneg %p224
        %p407 = pneg %p221
        %s408 = sand.u32 %s33, 1
        %s409 = scalar_lea.sflag [#allocation13], %s408
        %s410 = sand.u32 %s211, 1
        %s411 = smul.addr %s410, 8
        %s412 = scalar_lea.vmem [#allocation14], %s411
        %s413 = smul.u32 16, %s38
        %p414 = scmp.eq.s32.totalorder %s38, 0
        // Predicated region
        $region53: #{tpu_custom_call.1} parent=35 // pred_check
          %p415 = pneg %p414
        $region54: #{tpu_custom_call.1} parent=35 // pred_check_branch
          %417 = sbr.rel (%p415) target = $region56
        $region55: #{tpu_custom_call.1} parent=35 // pred_region
          %418 = vst [vmem:[#allocation2] sm:$0xff] 0.0
          %419 = vst [vmem:[#allocation2 + $0x8] sm:$0xff] 0.0
          %420 = vst [vmem:[#allocation2 + $0x10] sm:$0xff] 0.0
          %421 = vst [vmem:[#allocation2 + $0x18] sm:$0xff] 0.0
        $region56: #{tpu_custom_call.1} parent=35 // pred_fallthru
          _
        %v422 = vld [vmem:[#allocation2] sm:$0xff]
        %v423 = vld [vmem:[#allocation2 + $0x8] sm:$0xff]
        %v424 = vld [vmem:[#allocation2 + $0x10] sm:$0xff]
        %v425 = vld [vmem:[#allocation2 + $0x18] sm:$0xff]
        %v426 = vld [vmem:[%s332] sm:$0xff]
        %v427 = vld [vmem:[%s341] sm:$0xff]
        %v428 = vld [vmem:[%s341 + $0x8] sm:$0xff]
        %v429 = vld [vmem:[%s341 + $0x10] sm:$0xff]
        %v430 = vld [vmem:[%s341 + $0x18] sm:$0xff]
        %v431 = vld [vmem:[%s341 + $0x20] sm:$0xff]
        %v432 = vld [vmem:[%s341 + $0x28] sm:$0xff]
        %v433 = vld [vmem:[%s341 + $0x30] sm:$0xff]
        %v434 = vld [vmem:[%s341 + $0x38] sm:$0xff]
        %v435 = vld [vmem:[%s341 + $0x40] sm:$0xff]
        %v436 = vld [vmem:[%s341 + $0x48] sm:$0xff]
        %v437 = vld [vmem:[%s341 + $0x50] sm:$0xff]
        %v438 = vld [vmem:[%s341 + $0x58] sm:$0xff]
        %v439 = vld [vmem:[%s341 + $0x60] sm:$0xff]
        %v440 = vld [vmem:[%s341 + $0x68] sm:$0xff]
        %v441 = vld [vmem:[%s341 + $0x70] sm:$0xff]
        %v442 = vld [vmem:[%s341 + $0x78] sm:$0xff]
        %v443 = vld [vmem:[%s341 + $0x80] sm:$0xff]
        %v444 = vld [vmem:[%s341 + $0x88] sm:$0xff]
        %v445 = vld [vmem:[%s341 + $0x90] sm:$0xff]
        %v446 = vld [vmem:[%s341 + $0x98] sm:$0xff]
        %v447 = vld [vmem:[%s341 + $0xa0] sm:$0xff]
        %v448 = vld [vmem:[%s341 + $0xa8] sm:$0xff]
        %v449 = vld [vmem:[%s341 + $0xb0] sm:$0xff]
        %v450 = vld [vmem:[%s341 + $0xb8] sm:$0xff]
        %v451 = vld [vmem:[%s341 + $0xc0] sm:$0xff]
        %v452 = vld [vmem:[%s341 + $0xc8] sm:$0xff]
        %v453 = vld [vmem:[%s341 + $0xd0] sm:$0xff]
        %v454 = vld [vmem:[%s341 + $0xd8] sm:$0xff]
        %v455 = vld [vmem:[%s341 + $0xe0] sm:$0xff]
        %v456 = vld [vmem:[%s341 + $0xe8] sm:$0xff]
        %v457 = vld [vmem:[%s341 + $0xf0] sm:$0xff]
        %v458 = vld [vmem:[%s341 + $0xf8] sm:$0xff]
        %v459 = vld [vmem:[%s341 + $0x100] sm:$0xff]
        %v460 = vld [vmem:[%s341 + $0x108] sm:$0xff]
        %v461 = vld [vmem:[%s341 + $0x110] sm:$0xff]
        %v462 = vld [vmem:[%s341 + $0x118] sm:$0xff]
        %v463 = vld [vmem:[%s341 + $0x120] sm:$0xff]
        %v464 = vld [vmem:[%s341 + $0x128] sm:$0xff]
        %v465 = vld [vmem:[%s341 + $0x130] sm:$0xff]
        %v466 = vld [vmem:[%s341 + $0x138] sm:$0xff]
        %v467 = vld [vmem:[%s341 + $0x140] sm:$0xff]
        %v468 = vld [vmem:[%s341 + $0x148] sm:$0xff]
        %v469 = vld [vmem:[%s341 + $0x150] sm:$0xff]
        %v470 = vld [vmem:[%s341 + $0x158] sm:$0xff]
        %v471 = vld [vmem:[%s341 + $0x160] sm:$0xff]
        %v472 = vld [vmem:[%s341 + $0x168] sm:$0xff]
        %v473 = vld [vmem:[%s341 + $0x170] sm:$0xff]
        %v474 = vld [vmem:[%s341 + $0x178] sm:$0xff]
        %v475 = vld [vmem:[%s341 + $0x180] sm:$0xff]
        %v476 = vld [vmem:[%s341 + $0x188] sm:$0xff]
        %v477 = vld [vmem:[%s341 + $0x190] sm:$0xff]
        %v478 = vld [vmem:[%s341 + $0x198] sm:$0xff]
        %v479 = vld [vmem:[%s341 + $0x1a0] sm:$0xff]
        %v480 = vld [vmem:[%s341 + $0x1a8] sm:$0xff]
        %v481 = vld [vmem:[%s341 + $0x1b0] sm:$0xff]
        %v482 = vld [vmem:[%s341 + $0x1b8] sm:$0xff]
        %v483 = vld [vmem:[%s341 + $0x1c0] sm:$0xff]
        %v484 = vld [vmem:[%s341 + $0x1c8] sm:$0xff]
        %v485 = vld [vmem:[%s341 + $0x1d0] sm:$0xff]
        %v486 = vld [vmem:[%s341 + $0x1d8] sm:$0xff]
        %v487 = vld [vmem:[%s341 + $0x1e0] sm:$0xff]
        %v488 = vld [vmem:[%s341 + $0x1e8] sm:$0xff]
        %v489 = vld [vmem:[%s341 + $0x1f0] sm:$0xff]
        %v490 = vld [vmem:[%s341 + $0x1f8] sm:$0xff]
        %491 = vmatprep.subr.mxu0 %v488
        %492 = vmatpush1.msra.mxu0 %v487
        %493 = vmatprep.subr.mxu0 %v484
        %494 = vmatpush1.msra.mxu0 %v483
        %495 = vmatprep.subr.mxu0 %v480
        %496 = vmatpush1.msra.mxu0 %v479
        %497 = vmatprep.subr.mxu0 %v476
        %498 = vmatpush1.msra.mxu0 %v475
        %499 = vmatprep.subr.mxu0 %v472
        %500 = vmatpush1.msra.mxu0 %v471
        %501 = vmatprep.subr.mxu0 %v468
        %502 = vmatpush1.msra.mxu0 %v467
        %503 = vmatprep.subr.mxu0 %v464
        %504 = vmatpush1.msra.mxu0 %v463
        %505 = vmatprep.subr.mxu0 %v460
        %506 = vmatpush1.msra.mxu0 %v459
        %507 = vmatprep.subr.mxu0 %v456
        %508 = vmatpush1.msra.mxu0 %v455
        %509 = vmatprep.subr.mxu0 %v452
        %510 = vmatpush1.msra.mxu0 %v451
        %511 = vmatprep.subr.mxu0 %v448
        %512 = vmatpush1.msra.mxu0 %v447
        %513 = vmatprep.subr.mxu0 %v444
        %514 = vmatpush1.msra.mxu0 %v443
        %515 = vmatprep.subr.mxu0 %v440
        %516 = vmatpush1.msra.mxu0 %v439
        %517 = vmatprep.subr.mxu0 %v436
        %518 = vmatpush1.msra.mxu0 %v435
        %519 = vmatprep.subr.mxu0 %v432
        %520 = vmatpush1.msra.mxu0 %v431
        %521 = vmatprep.subr.mxu0 %v428
        %522 = vmatpush1.msra.mxu0 %v427
        %523 = vmatprep.subr.mxu0 0.0
        %524 = vmatpush2.msra.mxu0 0.0
        %525 = vmatprep.subr.mxu0 0.0
        %526 = vmatpush2.msra.mxu0 0.0
        %527 = vmatprep.subr.mxu0 0.0
        %528 = vmatpush2.msra.mxu0 0.0
        %529 = vmatprep.subr.mxu0 0.0
        %530 = vmatpush2.msra.mxu0 0.0
        %531 = vmatprep.subr.mxu0 0.0
        %532 = vmatpush2.msra.mxu0 0.0
        %533 = vmatprep.subr.mxu0 0.0
        %534 = vmatpush2.msra.mxu0 0.0
        %535 = vmatprep.subr.mxu0 0.0
        %536 = vmatpush2.msra.mxu0 0.0
        %537 = vmatprep.subr.mxu0 0.0
        %538 = vmatpush2.msra.mxu0 0.0
        %539 = vmatprep.subr.mxu0 0.0
        %540 = vmatpush2.msra.mxu0 0.0
        %541 = vmatprep.subr.mxu0 0.0
        %542 = vmatpush2.msra.mxu0 0.0
        %543 = vmatprep.subr.mxu0 0.0
        %544 = vmatpush2.msra.mxu0 0.0
        %545 = vmatprep.subr.mxu0 0.0
        %546 = vmatpush2.msra.mxu0 0.0
        %547 = vmatprep.subr.mxu0 0.0
        %548 = vmatpush2.msra.mxu0 0.0
        %549 = vmatprep.subr.mxu0 0.0
        %550 = vmatpush2.msra.mxu0 0.0
        %551 = vmatprep.subr.mxu0 0.0
        %552 = vmatpush2.msra.mxu0 0.0
        %553 = vmatprep.subr.mxu0 0.0
        %554 = vmatpush2.msra.mxu0 0.0
        %555 = vmatprep.mubr.f32.mxu0 0.0
        %556 = vmatmul.mubr.f32.gmra.mxu0 %v426
        %v557 = vpop.f32.mrf.mxu0
        %v558 = vadd.f32 0.0, %v557
        %v559 = vpop.f32.mrf.mxu0
        %v560 = vadd.f32 0.0, %v559
        %561 = vdwg.mxu0
        %562 = vmatprep.subr.mxu0 %v490
        %563 = vmatpush1.msra.mxu0 %v489
        %564 = vmatprep.subr.mxu0 %v486
        %565 = vmatpush1.msra.mxu0 %v485
        %566 = vmatprep.subr.mxu0 %v482
        %567 = vmatpush1.msra.mxu0 %v481
        %568 = vmatprep.subr.mxu0 %v478
        %569 = vmatpush1.msra.mxu0 %v477
        %570 = vmatprep.subr.mxu0 %v474
        %571 = vmatpush1.msra.mxu0 %v473
        %572 = vmatprep.subr.mxu0 %v470
        %573 = vmatpush1.msra.mxu0 %v469
        %574 = vmatprep.subr.mxu0 %v466
        %575 = vmatpush1.msra.mxu0 %v465
        %576 = vmatprep.subr.mxu0 %v462
        %577 = vmatpush1.msra.mxu0 %v461
        %578 = vmatprep.subr.mxu0 %v458
        %579 = vmatpush1.msra.mxu0 %v457
        %580 = vmatprep.subr.mxu0 %v454
        %581 = vmatpush1.msra.mxu0 %v453
        %582 = vmatprep.subr.mxu0 %v450
        %583 = vmatpush1.msra.mxu0 %v449
        %584 = vmatprep.subr.mxu0 %v446
        %585 = vmatpush1.msra.mxu0 %v445
        %586 = vmatprep.subr.mxu0 %v442
        %587 = vmatpush1.msra.mxu0 %v441
        %588 = vmatprep.subr.mxu0 %v438
        %589 = vmatpush1.msra.mxu0 %v437
        %590 = vmatprep.subr.mxu0 %v434
        %591 = vmatpush1.msra.mxu0 %v433
        %592 = vmatprep.subr.mxu0 %v430
        %593 = vmatpush1.msra.mxu0 %v429
        %594 = vmatprep.subr.mxu0 0.0
        %595 = vmatpush2.msra.mxu0 0.0
        %596 = vmatprep.subr.mxu0 0.0
        %597 = vmatpush2.msra.mxu0 0.0
        %598 = vmatprep.subr.mxu0 0.0
        %599 = vmatpush2.msra.mxu0 0.0
        %600 = vmatprep.subr.mxu0 0.0
        %601 = vmatpush2.msra.mxu0 0.0
        %602 = vmatprep.subr.mxu0 0.0
        %603 = vmatpush2.msra.mxu0 0.0
        %604 = vmatprep.subr.mxu0 0.0
        %605 = vmatpush2.msra.mxu0 0.0
        %606 = vmatprep.subr.mxu0 0.0
        %607 = vmatpush2.msra.mxu0 0.0
        %608 = vmatprep.subr.mxu0 0.0
        %609 = vmatpush2.msra.mxu0 0.0
        %610 = vmatprep.subr.mxu0 0.0
        %611 = vmatpush2.msra.mxu0 0.0
        %612 = vmatprep.subr.mxu0 0.0
        %613 = vmatpush2.msra.mxu0 0.0
        %614 = vmatprep.subr.mxu0 0.0
        %615 = vmatpush2.msra.mxu0 0.0
        %616 = vmatprep.subr.mxu0 0.0
        %617 = vmatpush2.msra.mxu0 0.0
        %618 = vmatprep.subr.mxu0 0.0
        %619 = vmatpush2.msra.mxu0 0.0
        %620 = vmatprep.subr.mxu0 0.0
        %621 = vmatpush2.msra.mxu0 0.0
        %622 = vmatprep.subr.mxu0 0.0
        %623 = vmatpush2.msra.mxu0 0.0
        %624 = vmatprep.subr.mxu0 0.0
        %625 = vmatpush2.msra.mxu0 0.0
        %626 = vmatprep.mubr.f32.mxu0 0.0
        %627 = vmatmul.mubr.f32.gmra.mxu0 %v426
        %v628 = vpop.f32.mrf.mxu0
        %v629 = vadd.f32 0.0, %v628
        %v630 = vpop.f32.mrf.mxu0
        %v631 = vadd.f32 0.0, %v630
        %632 = vdwg.mxu0
        %v633 = vadd.f32 %v422, %v558
        %v634 = vadd.f32 %v423, %v560
        %v635 = vadd.f32 %v424, %v629
        %v636 = vadd.f32 %v425, %v631
        %637 = vst [vmem:[#allocation2] sm:$0xff] %v633
        %638 = vst [vmem:[#allocation2 + $0x8] sm:$0xff] %v634
        %639 = vst [vmem:[#allocation2 + $0x10] sm:$0xff] %v635
        %640 = vst [vmem:[#allocation2 + $0x18] sm:$0xff] %v636
        %p641 = scmp.eq.s32.totalorder %s38, 1
        // Predicated region
        $region57: #{tpu_custom_call.1} parent=35 // pred_check
          %p642 = pneg %p641
        $region58: #{tpu_custom_call.1} parent=35 // pred_check_branch
          %644 = sbr.rel (%p642) target = $region60
        $region59: #{tpu_custom_call.1} parent=35 // pred_region
          %v645 = vld [vmem:[#allocation2] sm:$0xff]
          %v646 = vld [vmem:[#allocation2 + $0x8] sm:$0xff]
          %v647 = vld [vmem:[#allocation2 + $0x10] sm:$0xff]
          %v648 = vld [vmem:[#allocation2 + $0x18] sm:$0xff]
          %v649 = vld [vmem:[%s350] sm:$0xff]
          %v651 = vcombine.high %v649, %v649
          %v653 = vunpack.c.l.s4 1966171168
          %v654 = vunpack.c.0.s8 %v653
          %v655 = vlaneseq
          %v656 = vshrl.u32 %v655, 7
          %v657 = vsub.s32 %v654, %v656
          %v658 = vrot.slane %v649, %v657
          %v660 = vunpack.c.l.s4 1966171168
          %v661 = vunpack.c.0.s8 %v660
          %v662 = vlaneseq
          %v663 = vshrl.u32 %v662, 7
          %v664 = vsub.s32 %v661, %v663
          %v665 = vrot.slane %v651, %v664
          %v666 = vcombine.high %v658, %v658
          %v667 = vcombine.high %v665, %v665
          %v669 = vunpack.c.l.s4 1966171168
          %v670 = vunpack.c.0.s8 %v669
          %v671 = vlaneseq
          %v672 = vshrl.u32 %v671, 7
          %v673 = vsub.s32 %v670, %v672
          %v674 = vrot.slane %v658, %v673
          %v676 = vunpack.c.l.s4 1966171168
          %v677 = vunpack.c.0.s8 %v676
          %v678 = vlaneseq
          %v679 = vshrl.u32 %v678, 7
          %v680 = vsub.s32 %v677, %v679
          %v681 = vrot.slane %v665, %v680
          %v683 = vunpack.c.l.s4 1966171168
          %v684 = vunpack.c.0.s8 %v683
          %v685 = vlaneseq
          %v686 = vshrl.u32 %v685, 7
          %v687 = vsub.s32 %v684, %v686
          %v688 = vrot.slane %v666, %v687
          %v690 = vunpack.c.l.s4 1966171168
          %v691 = vunpack.c.0.s8 %v690
          %v692 = vlaneseq
          %v693 = vshrl.u32 %v692, 7
          %v694 = vsub.s32 %v691, %v693
          %v695 = vrot.slane %v667, %v694
          %v696 = vcombine.high %v674, %v674
          %v697 = vcombine.high %v681, %v681
          %v698 = vcombine.high %v688, %v688
          %v699 = vcombine.high %v695, %v695
          %v708 = vld [vmem:[%s359] sm:$0xff]
          %v710 = vcombine.high %v708, %v708
          %v712 = vunpack.c.l.s4 1966171168
          %v713 = vunpack.c.0.s8 %v712
          %v714 = vlaneseq
          %v715 = vshrl.u32 %v714, 7
          %v716 = vsub.s32 %v713, %v715
          %v717 = vrot.slane %v708, %v716
          %v719 = vunpack.c.l.s4 1966171168
          %v720 = vunpack.c.0.s8 %v719
          %v721 = vlaneseq
          %v722 = vshrl.u32 %v721, 7
          %v723 = vsub.s32 %v720, %v722
          %v724 = vrot.slane %v710, %v723
          %v725 = vcombine.high %v717, %v717
          %v726 = vcombine.high %v724, %v724
          %v728 = vunpack.c.l.s4 1966171168
          %v729 = vunpack.c.0.s8 %v728
          %v730 = vlaneseq
          %v731 = vshrl.u32 %v730, 7
          %v732 = vsub.s32 %v729, %v731
          %v733 = vrot.slane %v717, %v732
          %v735 = vunpack.c.l.s4 1966171168
          %v736 = vunpack.c.0.s8 %v735
          %v737 = vlaneseq
          %v738 = vshrl.u32 %v737, 7
          %v739 = vsub.s32 %v736, %v738
          %v740 = vrot.slane %v724, %v739
          %v742 = vunpack.c.l.s4 1966171168
          %v743 = vunpack.c.0.s8 %v742
          %v744 = vlaneseq
          %v745 = vshrl.u32 %v744, 7
          %v746 = vsub.s32 %v743, %v745
          %v747 = vrot.slane %v725, %v746
          %v749 = vunpack.c.l.s4 1966171168
          %v750 = vunpack.c.0.s8 %v749
          %v751 = vlaneseq
          %v752 = vshrl.u32 %v751, 7
          %v753 = vsub.s32 %v750, %v752
          %v754 = vrot.slane %v726, %v753
          %v755 = vcombine.high %v733, %v733
          %v756 = vcombine.high %v740, %v740
          %v757 = vcombine.high %v747, %v747
          %v758 = vcombine.high %v754, %v754
          %v767 = vcombine.high %v645, 0.0
          %v769 = vunpack.c.l.s4 1983009808
          %v770 = vunpack.c.0.s8 %v769
          %v771 = vlaneseq
          %v772 = vshrl.u32 %v771, 7
          %v773 = vsub.s32 %v770, %v772
          %v774 = vrot.slane %v645, %v773
          %v776 = vunpack.c.l.s4 1983009808
          %v777 = vunpack.c.0.s8 %v776
          %v778 = vlaneseq
          %v779 = vshrl.u32 %v778, 7
          %v780 = vsub.s32 %v777, %v779
          %v781 = vrot.slane %v767, %v780
          %v782 = vcombine.high %v646, 0.0
          %v784 = vunpack.c.l.s4 1983009808
          %v785 = vunpack.c.0.s8 %v784
          %v786 = vlaneseq
          %v787 = vshrl.u32 %v786, 7
          %v788 = vsub.s32 %v785, %v787
          %v789 = vrot.slane %v646, %v788
          %v791 = vunpack.c.l.s4 1983009808
          %v792 = vunpack.c.0.s8 %v791
          %v793 = vlaneseq
          %v794 = vshrl.u32 %v793, 7
          %v795 = vsub.s32 %v792, %v794
          %v796 = vrot.slane %v782, %v795
          %v797 = vcombine.low %v774, %v789
          %v798 = vcombine.high %v774, %v789
          %v800 = vunpack.c.l.s4 1934713408
          %v801 = vunpack.c.0.s8 %v800
          %v802 = vlaneseq
          %v803 = vshrl.u32 %v802, 7
          %v804 = vsub.s32 %v801, %v803
          %v805 = vrot.slane %v797, %v804
          %v807 = vunpack.c.l.s4 1934713408
          %v808 = vunpack.c.0.s8 %v807
          %v809 = vlaneseq
          %v810 = vshrl.u32 %v809, 7
          %v811 = vsub.s32 %v808, %v810
          %v812 = vrot.slane %v798, %v811
          %v813 = vcombine.low %v781, %v796
          %v814 = vcombine.high %v781, %v796
          %v816 = vunpack.c.l.s4 1934713408
          %v817 = vunpack.c.0.s8 %v816
          %v818 = vlaneseq
          %v819 = vshrl.u32 %v818, 7
          %v820 = vsub.s32 %v817, %v819
          %v821 = vrot.slane %v813, %v820
          %v823 = vunpack.c.l.s4 1934713408
          %v824 = vunpack.c.0.s8 %v823
          %v825 = vlaneseq
          %v826 = vshrl.u32 %v825, 7
          %v827 = vsub.s32 %v824, %v826
          %v828 = vrot.slane %v814, %v827
          %v829 = vcombine.high %v805, 0.0
          %v830 = vcombine.high %v812, 0.0
          %v831 = vcombine.high %v821, 0.0
          %v832 = vcombine.high %v828, 0.0
          %v833 = vlaneseq
          %v834 = vshrl.u32 %v833, 7
          %v835 = vsub.s32 0, %v834
          %v836 = vrot.slane %v674, %v835
          %v837 = vlaneseq
          %v838 = vshrl.u32 %v837, 7
          %v839 = vsub.s32 0, %v838
          %v840 = vrot.slane %v688, %v839
          %v841 = vlaneseq
          %v842 = vshrl.u32 %v841, 7
          %v843 = vsub.s32 0, %v842
          %v844 = vrot.slane %v696, %v843
          %v845 = vlaneseq
          %v846 = vshrl.u32 %v845, 7
          %v847 = vsub.s32 0, %v846
          %v848 = vrot.slane %v698, %v847
          %v849 = vlaneseq
          %v850 = vshrl.u32 %v849, 7
          %v851 = vsub.s32 0, %v850
          %v852 = vrot.slane %v681, %v851
          %v853 = vlaneseq
          %v854 = vshrl.u32 %v853, 7
          %v855 = vsub.s32 0, %v854
          %v856 = vrot.slane %v695, %v855
          %v857 = vlaneseq
          %v858 = vshrl.u32 %v857, 7
          %v859 = vsub.s32 0, %v858
          %v860 = vrot.slane %v697, %v859
          %v861 = vlaneseq
          %v862 = vshrl.u32 %v861, 7
          %v863 = vsub.s32 0, %v862
          %v864 = vrot.slane %v699, %v863
          %v873 = vmul.f32 %v805, %v836
          %v874 = vmul.f32 %v829, %v840
          %v875 = vmul.f32 %v812, %v844
          %v876 = vmul.f32 %v830, %v848
          %v877 = vmul.f32 %v821, %v852
          %v878 = vmul.f32 %v831, %v856
          %v879 = vmul.f32 %v828, %v860
          %v880 = vmul.f32 %v832, %v864
          %v881 = vlaneseq
          %v882 = vshrl.u32 %v881, 7
          %v883 = vsub.s32 0, %v882
          %v884 = vrot.slane %v733, %v883
          %v885 = vlaneseq
          %v886 = vshrl.u32 %v885, 7
          %v887 = vsub.s32 0, %v886
          %v888 = vrot.slane %v747, %v887
          %v889 = vlaneseq
          %v890 = vshrl.u32 %v889, 7
          %v891 = vsub.s32 0, %v890
          %v892 = vrot.slane %v755, %v891
          %v893 = vlaneseq
          %v894 = vshrl.u32 %v893, 7
          %v895 = vsub.s32 0, %v894
          %v896 = vrot.slane %v757, %v895
          %v897 = vlaneseq
          %v898 = vshrl.u32 %v897, 7
          %v899 = vsub.s32 0, %v898
          %v900 = vrot.slane %v740, %v899
          %v901 = vlaneseq
          %v902 = vshrl.u32 %v901, 7
          %v903 = vsub.s32 0, %v902
          %v904 = vrot.slane %v754, %v903
          %v905 = vlaneseq
          %v906 = vshrl.u32 %v905, 7
          %v907 = vsub.s32 0, %v906
          %v908 = vrot.slane %v756, %v907
          %v909 = vlaneseq
          %v910 = vshrl.u32 %v909, 7
          %v911 = vsub.s32 0, %v910
          %v912 = vrot.slane %v758, %v911
          %921 = vrot.lane.b32.xlu0 %v884, 64
          %v922 = vpop.permute.xlu0 %921
          %923 = vrot.lane.b32.xlu0 %v888, 64
          %v924 = vpop.permute.xlu0 %923
          %925 = vrot.lane.b32.xlu0 %v892, 64
          %v926 = vpop.permute.xlu0 %925
          %927 = vrot.lane.b32.xlu0 %v896, 64
          %v928 = vpop.permute.xlu0 %927
          %929 = vrot.lane.b32.xlu0 %v900, 64
          %v930 = vpop.permute.xlu0 %929
          %931 = vrot.lane.b32.xlu0 %v904, 64
          %v932 = vpop.permute.xlu0 %931
          %933 = vrot.lane.b32.xlu0 %v908, 64
          %v934 = vpop.permute.xlu0 %933
          %935 = vrot.lane.b32.xlu0 %v912, 64
          %v936 = vpop.permute.xlu0 %935
          %v945 = vmul.f32 %v805, %v922
          %v946 = vmul.f32 %v829, %v924
          %v947 = vmul.f32 %v812, %v926
          %v948 = vmul.f32 %v830, %v928
          %v949 = vmul.f32 %v821, %v930
          %v950 = vmul.f32 %v831, %v932
          %v951 = vmul.f32 %v828, %v934
          %v952 = vmul.f32 %v832, %v936
          %961 = vrot.lane.b32.xlu0 %v945, 64
          %v962 = vpop.permute.xlu0 %961
          %963 = vrot.lane.b32.xlu0 %v946, 64
          %v964 = vpop.permute.xlu0 %963
          %965 = vrot.lane.b32.xlu0 %v947, 64
          %v966 = vpop.permute.xlu0 %965
          %967 = vrot.lane.b32.xlu0 %v948, 64
          %v968 = vpop.permute.xlu0 %967
          %969 = vrot.lane.b32.xlu0 %v949, 64
          %v970 = vpop.permute.xlu0 %969
          %971 = vrot.lane.b32.xlu0 %v950, 64
          %v972 = vpop.permute.xlu0 %971
          %973 = vrot.lane.b32.xlu0 %v951, 64
          %v974 = vpop.permute.xlu0 %973
          %975 = vrot.lane.b32.xlu0 %v952, 64
          %v976 = vpop.permute.xlu0 %975
          %v985 = vsub.f32 %v873, %v962
          %v986 = vsub.f32 %v874, %v964
          %v987 = vsub.f32 %v875, %v966
          %v988 = vsub.f32 %v876, %v968
          %v989 = vsub.f32 %v877, %v970
          %v990 = vsub.f32 %v878, %v972
          %v991 = vsub.f32 %v879, %v974
          %v992 = vsub.f32 %v880, %v976
          %v993 = vmul.f32 %v805, %v884
          %v994 = vmul.f32 %v829, %v888
          %v995 = vmul.f32 %v812, %v892
          %v996 = vmul.f32 %v830, %v896
          %v997 = vmul.f32 %v821, %v900
          %v998 = vmul.f32 %v831, %v904
          %v999 = vmul.f32 %v828, %v908
          %v1000 = vmul.f32 %v832, %v912
          %1001 = vrot.lane.b32.xlu0 %v836, 64
          %v1002 = vpop.permute.xlu0 %1001
          %1003 = vrot.lane.b32.xlu0 %v840, 64
          %v1004 = vpop.permute.xlu0 %1003
          %1005 = vrot.lane.b32.xlu0 %v844, 64
          %v1006 = vpop.permute.xlu0 %1005
          %1007 = vrot.lane.b32.xlu0 %v848, 64
          %v1008 = vpop.permute.xlu0 %1007
          %1009 = vrot.lane.b32.xlu0 %v852, 64
          %v1010 = vpop.permute.xlu0 %1009
          %1011 = vrot.lane.b32.xlu0 %v856, 64
          %v1012 = vpop.permute.xlu0 %1011
          %1013 = vrot.lane.b32.xlu0 %v860, 64
          %v1014 = vpop.permute.xlu0 %1013
          %1015 = vrot.lane.b32.xlu0 %v864, 64
          %v1016 = vpop.permute.xlu0 %1015
          %v1025 = vmul.f32 %v805, %v1002
          %v1026 = vmul.f32 %v829, %v1004
          %v1027 = vmul.f32 %v812, %v1006
          %v1028 = vmul.f32 %v830, %v1008
          %v1029 = vmul.f32 %v821, %v1010
          %v1030 = vmul.f32 %v831, %v1012
          %v1031 = vmul.f32 %v828, %v1014
          %v1032 = vmul.f32 %v832, %v1016
          %1041 = vrot.lane.b32.xlu0 %v1025, 64
          %v1042 = vpop.permute.xlu0 %1041
          %1043 = vrot.lane.b32.xlu0 %v1026, 64
          %v1044 = vpop.permute.xlu0 %1043
          %1045 = vrot.lane.b32.xlu0 %v1027, 64
          %v1046 = vpop.permute.xlu0 %1045
          %1047 = vrot.lane.b32.xlu0 %v1028, 64
          %v1048 = vpop.permute.xlu0 %1047
          %1049 = vrot.lane.b32.xlu0 %v1029, 64
          %v1050 = vpop.permute.xlu0 %1049
          %1051 = vrot.lane.b32.xlu0 %v1030, 64
          %v1052 = vpop.permute.xlu0 %1051
          %1053 = vrot.lane.b32.xlu0 %v1031, 64
          %v1054 = vpop.permute.xlu0 %1053
          %1055 = vrot.lane.b32.xlu0 %v1032, 64
          %v1056 = vpop.permute.xlu0 %1055
          %v1065 = vadd.f32 %v993, %v1042
          %v1066 = vadd.f32 %v994, %v1044
          %v1067 = vadd.f32 %v995, %v1046
          %v1068 = vadd.f32 %v996, %v1048
          %v1069 = vadd.f32 %v997, %v1050
          %v1070 = vadd.f32 %v998, %v1052
          %v1071 = vadd.f32 %v999, %v1054
          %v1072 = vadd.f32 %v1000, %v1056
          %1081 = vrot.lane.b32.xlu0 %v1065, 64
          %v1082 = vpop.permute.xlu0 %1081
          %1083 = vrot.lane.b32.xlu0 %v1066, 64
          %v1084 = vpop.permute.xlu0 %1083
          %1085 = vrot.lane.b32.xlu0 %v1067, 64
          %v1086 = vpop.permute.xlu0 %1085
          %1087 = vrot.lane.b32.xlu0 %v1068, 64
          %v1088 = vpop.permute.xlu0 %1087
          %1089 = vrot.lane.b32.xlu0 %v1069, 64
          %v1090 = vpop.permute.xlu0 %1089
          %1091 = vrot.lane.b32.xlu0 %v1070, 64
          %v1092 = vpop.permute.xlu0 %1091
          %1093 = vrot.lane.b32.xlu0 %v1071, 64
          %v1094 = vpop.permute.xlu0 %1093
          %1095 = vrot.lane.b32.xlu0 %v1072, 64
          %v1096 = vpop.permute.xlu0 %1095
          %vm1105 = vcmask 523264
          %v1106 = vsel %vm1105, %v985, %v1082
          %v1107 = vsel %vm1105, %v986, %v1084
          %v1108 = vsel %vm1105, %v987, %v1086
          %v1109 = vsel %vm1105, %v988, %v1088
          %v1110 = vsel %vm1105, %v989, %v1090
          %v1111 = vsel %vm1105, %v990, %v1092
          %v1112 = vsel %vm1105, %v991, %v1094
          %v1113 = vsel %vm1105, %v992, %v1096
          %v1114 = vcombine.low %v1106, %v1108
          %v1116 = vunpack.c.l.s4 1983009808
          %v1117 = vunpack.c.0.s8 %v1116
          %v1118 = vlaneseq
          %v1119 = vshrl.u32 %v1118, 7
          %v1120 = vsub.s32 %v1117, %v1119
          %v1121 = vrot.slane %v1114, %v1120
          %v1122 = vcombine.low %v1107, %v1109
          %v1124 = vunpack.c.l.s4 1983009808
          %v1125 = vunpack.c.0.s8 %v1124
          %v1126 = vlaneseq
          %v1127 = vshrl.u32 %v1126, 7
          %v1128 = vsub.s32 %v1125, %v1127
          %v1129 = vrot.slane %v1122, %v1128
          %v1130 = vcombine.low %v1110, %v1112
          %v1132 = vunpack.c.l.s4 1983009808
          %v1133 = vunpack.c.0.s8 %v1132
          %v1134 = vlaneseq
          %v1135 = vshrl.u32 %v1134, 7
          %v1136 = vsub.s32 %v1133, %v1135
          %v1137 = vrot.slane %v1130, %v1136
          %v1138 = vcombine.low %v1111, %v1113
          %v1140 = vunpack.c.l.s4 1983009808
          %v1141 = vunpack.c.0.s8 %v1140
          %v1142 = vlaneseq
          %v1143 = vshrl.u32 %v1142, 7
          %v1144 = vsub.s32 %v1141, %v1143
          %v1145 = vrot.slane %v1138, %v1144
          %v1146 = vcombine.low %v1121, %v1129
          %v1148 = vunpack.c.l.s4 1934713408
          %v1149 = vunpack.c.0.s8 %v1148
          %v1150 = vlaneseq
          %v1151 = vshrl.u32 %v1150, 7
          %v1152 = vsub.s32 %v1149, %v1151
          %v1153 = vrot.slane %v1146, %v1152
          %v1154 = vcombine.low %v1137, %v1145
          %v1156 = vunpack.c.l.s4 1934713408
          %v1157 = vunpack.c.0.s8 %v1156
          %v1158 = vlaneseq
          %v1159 = vshrl.u32 %v1158, 7
          %v1160 = vsub.s32 %v1157, %v1159
          %v1161 = vrot.slane %v1154, %v1160
          %v1162 = vcombine.low %v1153, %v1161
          %v1163 = vcombine.high %v1153, %v1161
          %v1164 = vmul.f32 %v1162, 0.088388346
          %v1165 = vmul.f32 %v1163, 0.088388346
          %v1167 = vcombine.high %v647, %v647
          %v1169 = vunpack.c.l.s4 1966171168
          %v1170 = vunpack.c.0.s8 %v1169
          %v1171 = vlaneseq
          %v1172 = vshrl.u32 %v1171, 7
          %v1173 = vsub.s32 %v1170, %v1172
          %v1174 = vrot.slane %v647, %v1173
          %v1176 = vunpack.c.l.s4 1966171168
          %v1177 = vunpack.c.0.s8 %v1176
          %v1178 = vlaneseq
          %v1179 = vshrl.u32 %v1178, 7
          %v1180 = vsub.s32 %v1177, %v1179
          %v1181 = vrot.slane %v1167, %v1180
          %v1182 = vcombine.high %v1174, %v1174
          %v1183 = vcombine.high %v1181, %v1181
          %v1185 = vunpack.c.l.s4 1966171168
          %v1186 = vunpack.c.0.s8 %v1185
          %v1187 = vlaneseq
          %v1188 = vshrl.u32 %v1187, 7
          %v1189 = vsub.s32 %v1186, %v1188
          %v1190 = vrot.slane %v1174, %v1189
          %v1192 = vunpack.c.l.s4 1966171168
          %v1193 = vunpack.c.0.s8 %v1192
          %v1194 = vlaneseq
          %v1195 = vshrl.u32 %v1194, 7
          %v1196 = vsub.s32 %v1193, %v1195
          %v1197 = vrot.slane %v1181, %v1196
          %v1199 = vunpack.c.l.s4 1966171168
          %v1200 = vunpack.c.0.s8 %v1199
          %v1201 = vlaneseq
          %v1202 = vshrl.u32 %v1201, 7
          %v1203 = vsub.s32 %v1200, %v1202
          %v1204 = vrot.slane %v1182, %v1203
          %v1206 = vunpack.c.l.s4 1966171168
          %v1207 = vunpack.c.0.s8 %v1206
          %v1208 = vlaneseq
          %v1209 = vshrl.u32 %v1208, 7
          %v1210 = vsub.s32 %v1207, %v1209
          %v1211 = vrot.slane %v1183, %v1210
          %v1212 = vcombine.high %v1190, %v1190
          %v1213 = vcombine.high %v1197, %v1197
          %v1214 = vcombine.high %v1204, %v1204
          %v1215 = vcombine.high %v1211, %v1211
          %v1224 = vmul.f32 %v1190, %v674
          %v1225 = vmul.f32 %v1204, %v688
          %v1226 = vmul.f32 %v1212, %v696
          %v1227 = vmul.f32 %v1214, %v698
          %v1228 = vmul.f32 %v1197, %v681
          %v1229 = vmul.f32 %v1211, %v695
          %v1230 = vmul.f32 %v1213, %v697
          %v1231 = vmul.f32 %v1215, %v699
          %1232 = vrot.lane.b32.xlu0 %v733, 64
          %v1233 = vpop.permute.xlu0 %1232
          %1234 = vrot.lane.b32.xlu0 %v747, 64
          %v1235 = vpop.permute.xlu0 %1234
          %1236 = vrot.lane.b32.xlu0 %v755, 64
          %v1237 = vpop.permute.xlu0 %1236
          %1238 = vrot.lane.b32.xlu0 %v757, 64
          %v1239 = vpop.permute.xlu0 %1238
          %1240 = vrot.lane.b32.xlu0 %v740, 64
          %v1241 = vpop.permute.xlu0 %1240
          %1242 = vrot.lane.b32.xlu0 %v754, 64
          %v1243 = vpop.permute.xlu0 %1242
          %1244 = vrot.lane.b32.xlu0 %v756, 64
          %v1245 = vpop.permute.xlu0 %1244
          %1246 = vrot.lane.b32.xlu0 %v758, 64
          %v1247 = vpop.permute.xlu0 %1246
          %v1256 = vmul.f32 %v1190, %v1233
          %v1257 = vmul.f32 %v1204, %v1235
          %v1258 = vmul.f32 %v1212, %v1237
          %v1259 = vmul.f32 %v1214, %v1239
          %v1260 = vmul.f32 %v1197, %v1241
          %v1261 = vmul.f32 %v1211, %v1243
          %v1262 = vmul.f32 %v1213, %v1245
          %v1263 = vmul.f32 %v1215, %v1247
          %1272 = vrot.lane.b32.xlu0 %v1256, 64
          %v1273 = vpop.permute.xlu0 %1272
          %1274 = vrot.lane.b32.xlu0 %v1257, 64
          %v1275 = vpop.permute.xlu0 %1274
          %1276 = vrot.lane.b32.xlu0 %v1258, 64
          %v1277 = vpop.permute.xlu0 %1276
          %1278 = vrot.lane.b32.xlu0 %v1259, 64
          %v1279 = vpop.permute.xlu0 %1278
          %1280 = vrot.lane.b32.xlu0 %v1260, 64
          %v1281 = vpop.permute.xlu0 %1280
          %1282 = vrot.lane.b32.xlu0 %v1261, 64
          %v1283 = vpop.permute.xlu0 %1282
          %1284 = vrot.lane.b32.xlu0 %v1262, 64
          %v1285 = vpop.permute.xlu0 %1284
          %1286 = vrot.lane.b32.xlu0 %v1263, 64
          %v1287 = vpop.permute.xlu0 %1286
          %v1296 = vsub.f32 %v1224, %v1273
          %v1297 = vsub.f32 %v1225, %v1275
          %v1298 = vsub.f32 %v1226, %v1277
          %v1299 = vsub.f32 %v1227, %v1279
          %v1300 = vsub.f32 %v1228, %v1281
          %v1301 = vsub.f32 %v1229, %v1283
          %v1302 = vsub.f32 %v1230, %v1285
          %v1303 = vsub.f32 %v1231, %v1287
          %v1304 = vmul.f32 %v1190, %v733
          %v1305 = vmul.f32 %v1204, %v747
          %v1306 = vmul.f32 %v1212, %v755
          %v1307 = vmul.f32 %v1214, %v757
          %v1308 = vmul.f32 %v1197, %v740
          %v1309 = vmul.f32 %v1211, %v754
          %v1310 = vmul.f32 %v1213, %v756
          %v1311 = vmul.f32 %v1215, %v758
          %1312 = vrot.lane.b32.xlu0 %v674, 64
          %v1313 = vpop.permute.xlu0 %1312
          %1314 = vrot.lane.b32.xlu0 %v688, 64
          %v1315 = vpop.permute.xlu0 %1314
          %1316 = vrot.lane.b32.xlu0 %v696, 64
          %v1317 = vpop.permute.xlu0 %1316
          %1318 = vrot.lane.b32.xlu0 %v698, 64
          %v1319 = vpop.permute.xlu0 %1318
          %1320 = vrot.lane.b32.xlu0 %v681, 64
          %v1321 = vpop.permute.xlu0 %1320
          %1322 = vrot.lane.b32.xlu0 %v695, 64
          %v1323 = vpop.permute.xlu0 %1322
          %1324 = vrot.lane.b32.xlu0 %v697, 64
          %v1325 = vpop.permute.xlu0 %1324
          %1326 = vrot.lane.b32.xlu0 %v699, 64
          %v1327 = vpop.permute.xlu0 %1326
          %v1336 = vmul.f32 %v1190, %v1313
          %v1337 = vmul.f32 %v1204, %v1315
          %v1338 = vmul.f32 %v1212, %v1317
          %v1339 = vmul.f32 %v1214, %v1319
          %v1340 = vmul.f32 %v1197, %v1321
          %v1341 = vmul.f32 %v1211, %v1323
          %v1342 = vmul.f32 %v1213, %v1325
          %v1343 = vmul.f32 %v1215, %v1327
          %1352 = vrot.lane.b32.xlu0 %v1336, 64
          %v1353 = vpop.permute.xlu0 %1352
          %1354 = vrot.lane.b32.xlu0 %v1337, 64
          %v1355 = vpop.permute.xlu0 %1354
          %1356 = vrot.lane.b32.xlu0 %v1338, 64
          %v1357 = vpop.permute.xlu0 %1356
          %1358 = vrot.lane.b32.xlu0 %v1339, 64
          %v1359 = vpop.permute.xlu0 %1358
          %1360 = vrot.lane.b32.xlu0 %v1340, 64
          %v1361 = vpop.permute.xlu0 %1360
          %1362 = vrot.lane.b32.xlu0 %v1341, 64
          %v1363 = vpop.permute.xlu0 %1362
          %1364 = vrot.lane.b32.xlu0 %v1342, 64
          %v1365 = vpop.permute.xlu0 %1364
          %1366 = vrot.lane.b32.xlu0 %v1343, 64
          %v1367 = vpop.permute.xlu0 %1366
          %v1376 = vadd.f32 %v1304, %v1353
          %v1377 = vadd.f32 %v1305, %v1355
          %v1378 = vadd.f32 %v1306, %v1357
          %v1379 = vadd.f32 %v1307, %v1359
          %v1380 = vadd.f32 %v1308, %v1361
          %v1381 = vadd.f32 %v1309, %v1363
          %v1382 = vadd.f32 %v1310, %v1365
          %v1383 = vadd.f32 %v1311, %v1367
          %v1392 = vlaneseq
          %v1393 = vshrl.u32 %v1392, 7
          %v1394 = vsub.s32 0, %v1393
          %v1395 = vrot.slane %v1376, %v1394
          %v1396 = vlaneseq
          %v1397 = vshrl.u32 %v1396, 7
          %v1398 = vsub.s32 0, %v1397
          %v1399 = vrot.slane %v1377, %v1398
          %v1400 = vlaneseq
          %v1401 = vshrl.u32 %v1400, 7
          %v1402 = vsub.s32 0, %v1401
          %v1403 = vrot.slane %v1378, %v1402
          %v1404 = vlaneseq
          %v1405 = vshrl.u32 %v1404, 7
          %v1406 = vsub.s32 0, %v1405
          %v1407 = vrot.slane %v1379, %v1406
          %v1408 = vlaneseq
          %v1409 = vshrl.u32 %v1408, 7
          %v1410 = vsub.s32 0, %v1409
          %v1411 = vrot.slane %v1380, %v1410
          %v1412 = vlaneseq
          %v1413 = vshrl.u32 %v1412, 7
          %v1414 = vsub.s32 0, %v1413
          %v1415 = vrot.slane %v1381, %v1414
          %v1416 = vlaneseq
          %v1417 = vshrl.u32 %v1416, 7
          %v1418 = vsub.s32 0, %v1417
          %v1419 = vrot.slane %v1382, %v1418
          %v1420 = vlaneseq
          %v1421 = vshrl.u32 %v1420, 7
          %v1422 = vsub.s32 0, %v1421
          %v1423 = vrot.slane %v1383, %v1422
          %1424 = vrot.lane.b32.xlu0 %v1395, 64
          %v1425 = vpop.permute.xlu0 %1424
          %1426 = vrot.lane.b32.xlu0 %v1399, 64
          %v1427 = vpop.permute.xlu0 %1426
          %1428 = vrot.lane.b32.xlu0 %v1403, 64
          %v1429 = vpop.permute.xlu0 %1428
          %1430 = vrot.lane.b32.xlu0 %v1407, 64
          %v1431 = vpop.permute.xlu0 %1430
          %1432 = vrot.lane.b32.xlu0 %v1411, 64
          %v1433 = vpop.permute.xlu0 %1432
          %1434 = vrot.lane.b32.xlu0 %v1415, 64
          %v1435 = vpop.permute.xlu0 %1434
          %1436 = vrot.lane.b32.xlu0 %v1419, 64
          %v1437 = vpop.permute.xlu0 %1436
          %1438 = vrot.lane.b32.xlu0 %v1423, 64
          %v1439 = vpop.permute.xlu0 %1438
          %v1448 = vsel %vm1105, %v1296, %v1425
          %v1449 = vsel %vm1105, %v1297, %v1427
          %v1450 = vsel %vm1105, %v1298, %v1429
          %v1451 = vsel %vm1105, %v1299, %v1431
          %v1452 = vsel %vm1105, %v1300, %v1433
          %v1453 = vsel %vm1105, %v1301, %v1435
          %v1454 = vsel %vm1105, %v1302, %v1437
          %v1455 = vsel %vm1105, %v1303, %v1439
          %1456 = vst [vmem:[%s398] sm:$0xff] %v1164
          %1457 = vst [vmem:[%s398 + $0x8] sm:$0xff] %v1165
          %v1466 = vrot.slane %v1449, 7
          %vm1467 = vcmask 1041409
          %v1468 = vsel %vm1467, %v1466, %v1448
          %v1469 = vrot.slane %v1450, 6
          %vm1470 = vcmask 1042434
          %v1471 = vsel %vm1470, %v1469, %v1468
          %v1472 = vrot.slane %v1451, 5
          %vm1473 = vcmask 1043459
          %v1474 = vsel %vm1473, %v1472, %v1471
          %v1475 = vrot.slane %v1452, 4
          %vm1476 = vcmask 1044484
          %v1477 = vsel %vm1476, %v1475, %v1474
          %v1478 = vrot.slane %v1453, 3
          %vm1479 = vcmask 1045509
          %v1480 = vsel %vm1479, %v1478, %v1477
          %v1481 = vrot.slane %v1454, 2
          %vm1482 = vcmask 1046534
          %v1483 = vsel %vm1482, %v1481, %v1480
          %v1484 = vrot.slane %v1455, 1
          %vm1485 = vcmask 1047559
          %v1486 = vsel %vm1485, %v1484, %v1483
          %1488 = vst [vmem:[%s405] sm:$0xff] %v1486
          %1489 = vst [vmem:[%s412] sm:$0xff] %v648
        $region60: #{tpu_custom_call.1} parent=35 // pred_fallthru
          _
        %s1490 = sand.u32 %s159, 1
        %s1491 = scalar_lea.sflag [#allocation5], %s1490
        %s1492 = sand.u32 %s159, 1
        %s1493 = smul.addr %s1492, 16
        %s1494 = scalar_lea.vmem [#allocation11], %s1493
        %s1495 = sand.u32 %s33, 1
        %s1496 = scalar_lea.sflag [#allocation13], %s1495
        %s1497 = sand.u32 %s185, 1
        %s1498 = smul.addr %s1497, 8
        %s1499 = scalar_lea.vmem [#allocation12], %s1498
        %s1500 = sand.u32 %s33, 1
        %s1501 = scalar_lea.sflag [#allocation13], %s1500
        %s1502 = sand.u32 %s211, 1
        %s1503 = smul.addr %s1502, 8
        %s1504 = scalar_lea.vmem [#allocation14], %s1503
        // Predicated region
        $region61: #{tpu_custom_call.1} parent=35 // pred_check
          %p1505 = pneg %p169
        $region62: #{tpu_custom_call.1} parent=35 // pred_check_branch
          %1507 = sbr.rel (%p1505) target = $region64
        $region63: #{tpu_custom_call.1} parent=35 // pred_region
          %s1509 = ssub.s32 256, 256
          %1510 = vsyncadd %s1491, %s1509
          %s1511 = smul.addr %s37, 2
          %s1512 = smul.addr %s1511, 128
          %s1513 = scalar_lea.hbm %s4, %s1512
          %s1515 = sshll.u32 %s1494, 4
          %s1516 = int_to_ptr.vmem [resolvable:$true] %s1515
          %1518 = dma.vmem_to_hbm [thread:$0]  %s1516, 256, %s1513, %s1491
        $region64: #{tpu_custom_call.1} parent=35 // pred_fallthru
          _
        // Predicated region
        $region65: #{tpu_custom_call.1} parent=35 // pred_check
          %p1519 = pneg %p195
        $region66: #{tpu_custom_call.1} parent=35 // pred_check_branch
          %1521 = sbr.rel (%p1519) target = $region68
        $region67: #{tpu_custom_call.1} parent=35 // pred_region
          %s1523 = ssub.s32 128, 128
          %1524 = vsyncadd %s1496, %s1523
          %s1525 = smul.addr %s37, 128
          %s1526 = scalar_lea.hbm %s5, %s1525
          %s1528 = sshll.u32 %s1499, 4
          %s1529 = int_to_ptr.vmem [resolvable:$true] %s1528
          %1531 = dma.vmem_to_hbm [thread:$0]  %s1529, 128, %s1526, %s1496
        $region68: #{tpu_custom_call.1} parent=35 // pred_fallthru
          _
        // Predicated region
        $region69: #{tpu_custom_call.1} parent=35 // pred_check
          %p1532 = pneg %p221
        $region70: #{tpu_custom_call.1} parent=35 // pred_check_branch
          %1534 = sbr.rel (%p1532) target = $region72
        $region71: #{tpu_custom_call.1} parent=35 // pred_region
          %s1536 = ssub.s32 128, 128
          %1537 = vsyncadd %s1501, %s1536
          %s1538 = smul.addr %s37, 128
          %s1539 = scalar_lea.hbm %s6, %s1538
          %s1541 = sshll.u32 %s1504, 4
          %s1542 = int_to_ptr.vmem [resolvable:$true] %s1541
          %1544 = dma.vmem_to_hbm [thread:$0]  %s1542, 128, %s1539, %s1501
        $region72: #{tpu_custom_call.1} parent=35 // pred_fallthru
          _
      $region36: #{tpu_custom_call.1} parent=5 // pred_fallthru
        _
      %p1545 = scmp.le.s32.totalorder 2, %s28
      // Predicated region
      $region73: #{tpu_custom_call.1} parent=5 // pred_check
        %p1546 = pneg %p1545
      $region74: #{tpu_custom_call.1} parent=5 // pred_check_branch
        %1548 = sbr.rel (%p1546) target = $region76
      $region75: #{tpu_custom_call.1} parent=5 // pred_region
        %s1549 = ssub.s32 %s28, 2
        // Predicated region
        $region77: #{tpu_custom_call.1} parent=75 // pred_check
          %p1550 = pneg %p175
        $region78: #{tpu_custom_call.1} parent=75 // pred_check_branch
          %1552 = sbr.rel (%p1550) target = $region80
        $region79: #{tpu_custom_call.1} parent=75 // pred_region
          %s1553 = sand.u32 %s160, 1
          %s1554 = scalar_lea.sflag [#allocation5], %s1553
          %s1555 = sand.u32 %s160, 1
          %s1556 = smul.addr %s1555, 16
          %s1557 = scalar_lea.vmem [#allocation11], %s1556
          %1558 = dma.done %s1554, 256
        $region80: #{tpu_custom_call.1} parent=75 // pred_fallthru
          _
        // Predicated region
        $region81: #{tpu_custom_call.1} parent=75 // pred_check
          %p1559 = pneg %p201
        $region82: #{tpu_custom_call.1} parent=75 // pred_check_branch
          %1561 = sbr.rel (%p1559) target = $region84
        $region83: #{tpu_custom_call.1} parent=75 // pred_region
          %s1562 = sand.u32 %s34, 1
          %s1563 = scalar_lea.sflag [#allocation13], %s1562
          %s1564 = sand.u32 %s186, 1
          %s1565 = smul.addr %s1564, 8
          %s1566 = scalar_lea.vmem [#allocation12], %s1565
          %1567 = dma.done %s1563, 128
        $region84: #{tpu_custom_call.1} parent=75 // pred_fallthru
          _
        // Predicated region
        $region85: #{tpu_custom_call.1} parent=75 // pred_check
          %p1568 = pneg %p227
        $region86: #{tpu_custom_call.1} parent=75 // pred_check_branch
          %1570 = sbr.rel (%p1568) target = $region88
        $region87: #{tpu_custom_call.1} parent=75 // pred_region
          %s1571 = sand.u32 %s34, 1
          %s1572 = scalar_lea.sflag [#allocation13], %s1571
          %s1573 = sand.u32 %s212, 1
          %s1574 = smul.addr %s1573, 8
          %s1575 = scalar_lea.vmem [#allocation14], %s1574
          %1576 = dma.done %s1572, 128
        $region88: #{tpu_custom_call.1} parent=75 // pred_fallthru
          _
      $region76: #{tpu_custom_call.1} parent=5 // pred_fallthru
        _
    $region6: #{tpu_custom_call.1} parent=1 // loop_footer
      %s32 = sadd.s32 1, %s28
    $region7: #{tpu_custom_call.1} parent=1 // loop_footer_branch
      %27 = sbr.rel target = $region3
    $region8: #{tpu_custom_call.1} parent=1 // loop_exit
      _
    %1577 = vsyncpa [#allocation4], 1
    %s1578 = scalar_lea.sflag [#allocation4], 1
    %1579 = vsyncpa %s1578, 1
    %1580 = vsyncpa [#allocation7], 1
    %s1581 = scalar_lea.sflag [#allocation7], 1
    %1582 = vsyncpa %s1581, 1
    %1583 = vsyncpa [#allocation10], 1
    %s1584 = scalar_lea.sflag [#allocation10], 1
    %1585 = vsyncpa %s1584, 1
    %1586 = vsyncpa [#allocation5], 1
    %s1587 = scalar_lea.sflag [#allocation5], 1
    %1588 = vsyncpa %s1587, 1
    %1589 = vsyncpa [#allocation13], 1
    %s1590 = scalar_lea.sflag [#allocation13], 1
    %1591 = vsyncpa %s1590, 1

</llo_original>
